<compile_context>
chip_gen: v7x
topology: tpu7x:2x2x1
jax: 0.10.0
libtpu: 0.0.40
codegen_flags: <defaults>
</compile_context>

<pallas_src>
import math
from functools import partial

import numpy as np
import jax
import jax.numpy as jnp
from jax import lax
from jax.experimental import pallas as pl
from jax.experimental.pallas import tpu as pltpu

TWO_PI = float(2.0 * np.pi)

# murmur3 fmix32 constants as two's-complement int32 literals.
_C1 = -2048144789       # 0x85EBCA6B
_C2 = -1028477387       # 0xC2B2AE35
_GOLD1 = -1640531535    # 0x9E3779B1
_GOLD2 = -1640531527    # 0x9E3779B9


def _round_up(x, m):
    return ((x + m - 1) // m) * m


def _choose_sblk(rows):
    """(batch, harmonic) rows per block: multiple of 16 (Box-Muller pairs the two
    sublane halves of the block), capped at 128."""
    return min(128, _round_up(max(rows, 1), 16))


def _choose_tblk(upp, total_t, target=4096, const_budget_bytes=12 << 20):
    """Time block (samples): multiple of `upp` and of 128, ~`target`, with the
    double-buffered expansion constants ([e;e2] + e = 3*L*T f32) capped so the
    kernel stays well inside v7x's 64 MiB VMEM."""
    g = math.gcd(upp, 128)
    base = upp * (128 // g)                     # minimal valid block
    tblk = base * max(1, target // base)
    tblk = min(tblk, _round_up(total_t, base))  # no larger than padded T
    while tblk > base and 24 * (tblk // upp) * tblk > const_budget_bytes:
        tblk -= base
    return tblk


def _lsr32(x, k):
    """Logical right shift for int32 (arithmetic shift + mask)."""
    return jnp.bitwise_and(jnp.right_shift(x, k), jnp.int32((1 << (32 - k)) - 1))


def _mix32(x):
    """murmur3 fmix32 avalanche (int32 wraparound == uint32 semantics)."""
    x = jnp.bitwise_xor(x, _lsr32(x, 16))
    x = x * jnp.int32(_C1)
    x = jnp.bitwise_xor(x, _lsr32(x, 13))
    x = x * jnp.int32(_C2)
    x = jnp.bitwise_xor(x, _lsr32(x, 16))
    return x


def _sinegen_kernel(sine_amp, noise_std, lblk, t_total,
                    seed_ref, fr_ref, es_ref, e_ref, sine_ref, noise_ref):
    """One (row-block, time-block) tile.

    fr_ref   : (1, SBLK, 3*LBLK) packed frames, columns [p0 | rad | uv]
               p0  = frame start phase (mod 2*pi)
               rad = per-sample phase increment of the frame
               uv  = voiced flag (0/1)
    es_ref   : (2*LBLK, TBLK) stacked expansion matrix [e; e2] (resident constant)
               e[l, q] = 1{q // upp == l},  e2[l, q] = (q % upp + 1) * e[l, q]
    e_ref    : (LBLK, TBLK)  e alone, for the uv nearest-upsample (resident constant)
    sine_ref : (SBLK, TBLK)  output: uv-gated sine + noise
    noise_ref: (SBLK, TBLK)  output: noise
    """
    r = pl.program_id(0)
    t = pl.program_id(1)
    sblk, tblk = sine_ref.shape
    half = sblk // 2

    fr = fr_ref[0]                                       # (SBLK, 3*LBLK)

    # ---- frame -> sample expansion on the MXU (single HIGHEST dot for phase) ----
    phase = jnp.dot(fr[:, :2 * lblk], es_ref[...],
                    preferred_element_type=jnp.float32,
                    precision=lax.Precision.HIGHEST)
    uv_up = jnp.dot(fr[:, 2 * lblk:], e_ref[...],
                    preferred_element_type=jnp.float32)   # exact 0/1 selection

    # Range reduction on the VPU (no EUP divide), then sine.
    phase = phase - jnp.float32(TWO_PI) * jnp.floor(phase * jnp.float32(1.0 / TWO_PI))
    sine = jnp.sin(phase)

    amp_up = uv_up * jnp.float32(sine_amp)
    # noise_amp = uv*noise_std + (1-uv)*sine_amp/3 is affine in uv -> no extra matmul.
    nam_up = (uv_up * jnp.float32(noise_std - sine_amp / 3.0)
              + jnp.float32(sine_amp / 3.0))

    # ---- Gaussian noise: counter-hash RNG + paired Box-Muller (half the rows) ----
    rows = lax.broadcasted_iota(jnp.int32, (half, tblk), 0) + r * sblk
    cols = lax.broadcasted_iota(jnp.int32, (half, tblk), 1) + t * tblk
    key = _mix32(jnp.bitwise_xor(seed_ref[0], jnp.int32(_GOLD1)))
    h1 = _mix32(jnp.bitwise_xor(rows * jnp.int32(t_total) + cols, key))
    h2 = _mix32(h1 + jnp.int32(_GOLD2))
    u1 = (jnp.bitwise_and(h1, jnp.int32(0x7FFFFF)).astype(jnp.float32)
          + jnp.float32(0.5)) * jnp.float32(1.0 / (1 << 23))
    u2 = (jnp.bitwise_and(h2, jnp.int32(0x7FFFFF)).astype(jnp.float32)
          + jnp.float32(0.5)) * jnp.float32(1.0 / (1 << 23))
    rr = jnp.sqrt(jnp.float32(-2.0) * jnp.log(u1))
    th = jnp.float32(TWO_PI) * u2
    z = jnp.concatenate([rr * jnp.cos(th), rr * jnp.sin(th)], axis=0)  # (SBLK, TBLK)

    noise = nam_up * z
    noise_ref[...] = noise
    sine_ref[...] = sine * amp_up + noise


def sinegen_forward(f0, upp, *, samp_rate, harmonic_num=0, sine_amp=0.1,
                    noise_std=0.003, voiced_threshold=0.0,
                    noise_seed=0, prev_phase=None, channels_last=True):
    """JAX/Pallas equivalent of SineGen.forward(f0, upp).

    f0: (B, L). Returns (sine_waves, uv, noise) of shapes
    (B, L*upp, harmonic_num+1), (B, L*upp, 1), (B, L*upp, harmonic_num+1)
    (or (B, D, T) for sine/noise when channels_last=False, which skips two
    sample-rate HBM transposes)."""
    f0 = jnp.asarray(f0, jnp.float32)
    B, L = f0.shape
    D = harmonic_num + 1
    T = L * upp
    R = B * D

    # -------- frame-rate preprocessing (O(B*D*L), negligible) --------
    harm = jnp.arange(1, D + 1, dtype=jnp.float32)
    radf = f0[:, None, :] * harm[None, :, None] / float(samp_rate) * TWO_PI   # (B,D,L)
    uvf = (f0 > voiced_threshold).astype(jnp.float32)                          # (B,L)
    uvf_bd = jnp.broadcast_to(uvf[:, None, :], (B, D, L))

    if prev_phase is None:
        prev_phase = jnp.zeros((B, D), jnp.float32)
    else:
        prev_phase = jnp.asarray(prev_phase, jnp.float32).reshape(B, D)

    # Exclusive cumsum of per-frame phase advance -> start phase of every frame.
    # Each term is pre-reduced mod 2*pi so f32 partial sums stay bounded.
    frame_adv = jnp.mod(radf * float(upp), TWO_PI)
    p0f = jnp.pad(jnp.cumsum(frame_adv, axis=-1)[..., :-1],
                  ((0, 0), (0, 0), (1, 0)))
    p0f = jnp.mod(prev_phase[:, :, None] + p0f, TWO_PI)

    # -------- tiling --------
    TBLK = _choose_tblk(upp, T)
    LBLK = TBLK // upp
    Lpad = _round_up(L, LBLK)
    Tpad = Lpad * upp
    n_t = Lpad // LBLK
    SBLK = _choose_sblk(R)
    Rpad = _round_up(R, SBLK)
    n_r = Rpad // SBLK

    def to_blocks(x):  # (B, D, L) -> (n_t, Rpad, LBLK)
        x = jnp.pad(x.reshape(R, L), ((0, Rpad - R), (0, Lpad - L)))
        return jnp.transpose(x.reshape(Rpad, n_t, LBLK), (1, 0, 2))

    # Single packed frame-rate input: columns [p0 | rad | uv] -> one DMA per tile.
    frames = jnp.concatenate(
        [to_blocks(p0f), to_blocks(radf), to_blocks(uvf_bd)], axis=-1)

    # Constant expansion matrices (nearest upsample + within-frame sample index),
    # stacked so the phase expansion is a single HIGHEST-precision matmul.
    q = np.arange(TBLK)
    e_np = (q[None, :] // upp == np.arange(LBLK)[:, None]).astype(np.float32)
    e2_np = e_np * (q % upp + 1).astype(np.float32)[None, :]
    es_mat = jnp.asarray(np.concatenate([e_np, e2_np], axis=0))   # (2*LBLK, TBLK)
    e_mat = jnp.asarray(e_np)                                      # (LBLK, TBLK)

    seed = jnp.asarray([noise_seed], jnp.int32)

    frame_spec = pl.BlockSpec((1, SBLK, 3 * LBLK), lambda r, t, s: (t, r, 0))
    es_spec = pl.BlockSpec((2 * LBLK, TBLK), lambda r, t, s: (0, 0))
    e_spec = pl.BlockSpec((LBLK, TBLK), lambda r, t, s: (0, 0))
    out_spec = pl.BlockSpec((SBLK, TBLK), lambda r, t, s: (r, t))

    vmem_est = 2 * 4 * (3 * LBLK * TBLK + 2 * SBLK * TBLK + 3 * SBLK * LBLK)
    vmem_limit = int(min(max(32 << 20, vmem_est + (4 << 20)), 120 << 20))

    kernel = partial(_sinegen_kernel, float(sine_amp), float(noise_std),
                     LBLK, int(Tpad))

    sine_rt, noise_rt = pl.pallas_call(
        kernel,
        out_shape=(jax.ShapeDtypeStruct((Rpad, Tpad), jnp.float32),
                   jax.ShapeDtypeStruct((Rpad, Tpad), jnp.float32)),
        grid_spec=pltpu.PrefetchScalarGridSpec(
            num_scalar_prefetch=1,
            grid=(n_r, n_t),
            in_specs=[frame_spec, es_spec, e_spec],
            out_specs=[out_spec, out_spec],
        ),
        compiler_params=pltpu.CompilerParams(
            dimension_semantics=("parallel", "parallel"),
            vmem_limit_bytes=vmem_limit),
    )(seed, frames, es_mat, e_mat)

    sine_bdt = sine_rt[:R, :T].reshape(B, D, T)
    noise_bdt = noise_rt[:R, :T].reshape(B, D, T)
    uv = jnp.broadcast_to(uvf[:, :, None], (B, L, upp)).reshape(B, T)[:, :, None]

    # TODO(synk): the PyTorch module mutates self.prev_phase across calls; here the
    # caller threads state via `prev_phase` (new value = mod(prev + sum(frame_adv, -1),
    # 2*pi), computable at frame rate).
    if channels_last:   # torch layout (B, T, D) — costs two sample-rate transposes.
        return (jnp.transpose(sine_bdt, (0, 2, 1)), uv,
                jnp.transpose(noise_bdt, (0, 2, 1)))
    return sine_bdt, uv, noise_bdt


def _ref_sinegen_clean(f0, upp, samp_rate, harmonic_num, sine_amp, voiced_threshold):
    """Pure-JAX deterministic part of SineGen (uv-gated sine, pre-noise) + uv."""
    D = harmonic_num + 1
    harm = jnp.arange(1, D + 1, dtype=jnp.float32)
    rad = f0[:, :, None] * harm / float(samp_rate) * TWO_PI
    rad_up = jnp.repeat(rad, upp, axis=1)                    # (B, T, D)
    phase = jnp.mod(jnp.cumsum(rad_up, axis=1), TWO_PI)
    uv = (f0 > voiced_threshold).astype(jnp.float32)
    uv_up = jnp.repeat(uv, upp, axis=1)[:, :, None]          # (B, T, 1)
    return jnp.sin(phase) * sine_amp * uv_up, uv_up


if __name__ == "__main__":
    key = jax.random.PRNGKey(0)
    k_f0, k_mask = jax.random.split(key, 2)

    B, L, upp = 2, 8, 32                 # -> T = 256 upsampled samples
    samp_rate = 16000
    harmonic_num = 3                     # dim = 4 harmonics
    sine_amp, noise_std, vth = 0.1, 0.003, 0.0

    f0 = jax.random.uniform(k_f0, (B, L), minval=80.0, maxval=400.0)
    voiced_mask = jax.random.bernoulli(k_mask, 0.8, (B, L)).astype(jnp.float32)
    f0 = f0 * voiced_mask                # some unvoiced (f0 == 0) frames

    sine, uv, noise = sinegen_forward(
        f0, upp, samp_rate=samp_rate, harmonic_num=harmonic_num,
        sine_amp=sine_amp, noise_std=noise_std, voiced_threshold=vth,
        noise_seed=1234)
    jax.block_until_ready((sine, uv, noise))

    D = harmonic_num + 1
    T = L * upp
    assert sine.shape == (B, T, D) and uv.shape == (B, T, 1) and noise.shape == (B, T, D)

    sine_clean_ref, uv_ref = _ref_sinegen_clean(f0, upp, samp_rate, harmonic_num,
                                                sine_amp, vth)
    sine_np, uv_np, noise_np = map(np.asarray, (sine, uv, noise))

    # uv: exact.
    np.testing.assert_allclose(uv_np, np.asarray(uv_ref), atol=0, rtol=0)
    # Deterministic part: sine_out - noise_out == uv * sine_amp * sin(phase).
    np.testing.assert_allclose(sine_np - noise_np, np.asarray(sine_clean_ref),
                               atol=2e-3, rtol=0)
    # Noise uses an in-kernel counter-hash PRNG (different stream than torch.randn /
    # jax.random), so check gating and statistics rather than element values.
    assert np.all(np.isfinite(noise_np))
    voiced = np.broadcast_to(uv_np > 0.5, noise_np.shape)
    assert np.all(np.abs(noise_np[voiced]) <= 8.0 * noise_std)
    assert np.all(np.abs(noise_np[~voiced]) <= 8.0 * sine_amp / 3.0)
    if voiced.any():
        assert 0.5 * noise_std < noise_np[voiced].std() < 1.5 * noise_std
    if (~voiced).any():
        assert 0.5 * sine_amp / 3.0 < noise_np[~voiced].std() < 1.5 * sine_amp / 3.0
        # Unvoiced samples: sine output is exactly the noise (amp gate is exactly 0).
        np.testing.assert_array_equal(sine_np[~voiced], noise_np[~voiced])

    print("KERNEL_OK")
</pallas_src>

<mosaic_0001>
module attributes {stable_mosaic.version = 11 : i64} {
  func.func @_sinegen_kernel(%arg0: i32, %arg1: i32, %arg2: memref<1xi32, #tpu.memory_space<smem>>, %arg3: memref<1x16x24xf32, #tpu.memory_space<vmem>>, %arg4: memref<16x256xf32, #tpu.memory_space<vmem>>, %arg5: memref<8x256xf32, #tpu.memory_space<vmem>>, %arg6: memref<16x256xf32, #tpu.memory_space<vmem>>, %arg7: memref<16x256xf32, #tpu.memory_space<vmem>>) attributes {dimension_semantics = [#tpu.dimension_semantics<parallel>, #tpu.dimension_semantics<parallel>], iteration_bounds = array<i64: 1, 1>, scalar_prefetch = 1 : i64, scratch_operands = 0 : i64, tpu.core_type = #tpu.core_type<tc>, window_params = [{transform_indices = @transform_0, window_bounds = array<i64: 1, 16, 24>}, {pipeline_mode = #tpu.pipeline_mode<synchronous>, transform_indices = @transform_1, window_bounds = array<i64: 16, 256>}, {pipeline_mode = #tpu.pipeline_mode<synchronous>, transform_indices = @transform_2, window_bounds = array<i64: 8, 256>}, {transform_indices = @transform_3, window_bounds = array<i64: 16, 256>}, {transform_indices = @transform_4, window_bounds = array<i64: 16, 256>}]} {
    %c0 = arith.constant 0 : index
    %c0_0 = arith.constant 0 : index
    %c0_1 = arith.constant 0 : index
    %0 = vector.load %arg3[%c0, %c0_0, %c0_1] : memref<1x16x24xf32, #tpu.memory_space<vmem>>, vector<1x16x24xf32>
    %1 = vector.shape_cast %0 : vector<1x16x24xf32> to vector<16x24xf32>
    %2 = vector.extract_strided_slice %1 {offsets = [0, 0], sizes = [16, 16], strides = [1, 1]} : vector<16x24xf32> to vector<16x16xf32>
    %c0_2 = arith.constant 0 : index
    %c0_3 = arith.constant 0 : index
    %3 = vector.load %arg4[%c0_2, %c0_3] : memref<16x256xf32, #tpu.memory_space<vmem>>, vector<16x256xf32>
    %cst = arith.constant dense<0.000000e+00> : vector<16x256xf32>
    %4 = tpu.matmul %2, %3, %cst {dimension_numbers = #tpu.dot_dimension_numbers<[1], [0], [0], [1], [0, 0, 1, 1], [], []>, precision = #tpu.contract_precision<fp32>} : vector<16x16xf32>, vector<16x256xf32>, vector<16x256xf32> -> vector<16x256xf32>
    %5 = vector.extract_strided_slice %1 {offsets = [0, 16], sizes = [16, 8], strides = [1, 1]} : vector<16x24xf32> to vector<16x8xf32>
    %c0_4 = arith.constant 0 : index
    %c0_5 = arith.constant 0 : index
    %6 = vector.load %arg5[%c0_4, %c0_5] : memref<8x256xf32, #tpu.memory_space<vmem>>, vector<8x256xf32>
    %cst_6 = arith.constant dense<0.000000e+00> : vector<16x256xf32>
    %7 = tpu.matmul %5, %6, %cst_6 {dimension_numbers = #tpu.dot_dimension_numbers<[1], [0], [0], [1], [0, 0, 1, 1], [], []>} : vector<16x8xf32>, vector<8x256xf32>, vector<16x256xf32> -> vector<16x256xf32>
    %cst_7 = arith.constant 0.159154937 : f32
    %8 = vector.broadcast %cst_7 : f32 to vector<16x256xf32>
    %9 = arith.mulf %4, %8 : vector<16x256xf32>
    %10 = math.floor %9 : vector<16x256xf32>
    %cst_8 = arith.constant 6.28318548 : f32
    %11 = vector.broadcast %cst_8 : f32 to vector<16x256xf32>
    %12 = arith.mulf %11, %10 : vector<16x256xf32>
    %13 = arith.subf %4, %12 : vector<16x256xf32>
    %14 = math.sin %13 : vector<16x256xf32>
    %cst_9 = arith.constant 1.000000e-01 : f32
    %15 = vector.broadcast %cst_9 : f32 to vector<16x256xf32>
    %16 = arith.mulf %7, %15 : vector<16x256xf32>
    %cst_10 = arith.constant -0.0303333327 : f32
    %17 = vector.broadcast %cst_10 : f32 to vector<16x256xf32>
    %18 = arith.mulf %7, %17 : vector<16x256xf32>
    %cst_11 = arith.constant 0.0333333351 : f32
    %19 = vector.broadcast %cst_11 : f32 to vector<16x256xf32>
    %20 = arith.addf %18, %19 : vector<16x256xf32>
    %21 = tpu.iota {dimensions = array<i32: 0>} : vector<8x256xi32>
    %c16_i32 = arith.constant 16 : i32
    %22 = arith.muli %arg0, %c16_i32 : i32
    %23 = vector.broadcast %22 : i32 to vector<8x256xi32>
    %24 = arith.addi %21, %23 : vector<8x256xi32>
    %25 = tpu.iota {dimensions = array<i32: 1>} : vector<8x256xi32>
    %c256_i32 = arith.constant 256 : i32
    %26 = arith.muli %arg1, %c256_i32 : i32
    %27 = vector.broadcast %26 : i32 to vector<8x256xi32>
    %28 = arith.addi %25, %27 : vector<8x256xi32>
    %c0_12 = arith.constant 0 : index
    %29 = memref.load %arg2[%c0_12] : memref<1xi32, #tpu.memory_space<smem>>
    %c-1640531535_i32 = arith.constant -1640531535 : i32
    %30 = arith.xori %29, %c-1640531535_i32 : i32
    %c16_i32_13 = arith.constant 16 : i32
    %31 = arith.shrsi %30, %c16_i32_13 : i32
    %c65535_i32 = arith.constant 65535 : i32
    %32 = arith.andi %31, %c65535_i32 : i32
    %33 = arith.xori %30, %32 : i32
    %c-2048144789_i32 = arith.constant -2048144789 : i32
    %34 = arith.muli %33, %c-2048144789_i32 : i32
    %c13_i32 = arith.constant 13 : i32
    %35 = arith.shrsi %34, %c13_i32 : i32
    %c524287_i32 = arith.constant 524287 : i32
    %36 = arith.andi %35, %c524287_i32 : i32
    %37 = arith.xori %34, %36 : i32
    %c-1028477387_i32 = arith.constant -1028477387 : i32
    %38 = arith.muli %37, %c-1028477387_i32 : i32
    %c16_i32_14 = arith.constant 16 : i32
    %39 = arith.shrsi %38, %c16_i32_14 : i32
    %c65535_i32_15 = arith.constant 65535 : i32
    %40 = arith.andi %39, %c65535_i32_15 : i32
    %41 = arith.xori %38, %40 : i32
    %c256_i32_16 = arith.constant 256 : i32
    %42 = vector.broadcast %c256_i32_16 : i32 to vector<8x256xi32>
    %43 = arith.muli %24, %42 : vector<8x256xi32>
    %44 = arith.addi %43, %28 : vector<8x256xi32>
    %45 = vector.broadcast %41 : i32 to vector<8x256xi32>
    %46 = arith.xori %44, %45 : vector<8x256xi32>
    %c16_i32_17 = arith.constant 16 : i32
    %47 = vector.broadcast %c16_i32_17 : i32 to vector<8x256xi32>
    %48 = arith.shrsi %46, %47 : vector<8x256xi32>
    %c65535_i32_18 = arith.constant 65535 : i32
    %49 = vector.broadcast %c65535_i32_18 : i32 to vector<8x256xi32>
    %50 = arith.andi %48, %49 : vector<8x256xi32>
    %51 = arith.xori %46, %50 : vector<8x256xi32>
    %c-2048144789_i32_19 = arith.constant -2048144789 : i32
    %52 = vector.broadcast %c-2048144789_i32_19 : i32 to vector<8x256xi32>
    %53 = arith.muli %51, %52 : vector<8x256xi32>
    %c13_i32_20 = arith.constant 13 : i32
    %54 = vector.broadcast %c13_i32_20 : i32 to vector<8x256xi32>
    %55 = arith.shrsi %53, %54 : vector<8x256xi32>
    %c524287_i32_21 = arith.constant 524287 : i32
    %56 = vector.broadcast %c524287_i32_21 : i32 to vector<8x256xi32>
    %57 = arith.andi %55, %56 : vector<8x256xi32>
    %58 = arith.xori %53, %57 : vector<8x256xi32>
    %c-1028477387_i32_22 = arith.constant -1028477387 : i32
    %59 = vector.broadcast %c-1028477387_i32_22 : i32 to vector<8x256xi32>
    %60 = arith.muli %58, %59 : vector<8x256xi32>
    %c16_i32_23 = arith.constant 16 : i32
    %61 = vector.broadcast %c16_i32_23 : i32 to vector<8x256xi32>
    %62 = arith.shrsi %60, %61 : vector<8x256xi32>
    %c65535_i32_24 = arith.constant 65535 : i32
    %63 = vector.broadcast %c65535_i32_24 : i32 to vector<8x256xi32>
    %64 = arith.andi %62, %63 : vector<8x256xi32>
    %65 = arith.xori %60, %64 : vector<8x256xi32>
    %c-1640531527_i32 = arith.constant -1640531527 : i32
    %66 = vector.broadcast %c-1640531527_i32 : i32 to vector<8x256xi32>
    %67 = arith.addi %65, %66 : vector<8x256xi32>
    %c16_i32_25 = arith.constant 16 : i32
    %68 = vector.broadcast %c16_i32_25 : i32 to vector<8x256xi32>
    %69 = arith.shrsi %67, %68 : vector<8x256xi32>
    %c65535_i32_26 = arith.constant 65535 : i32
    %70 = vector.broadcast %c65535_i32_26 : i32 to vector<8x256xi32>
    %71 = arith.andi %69, %70 : vector<8x256xi32>
    %72 = arith.xori %67, %71 : vector<8x256xi32>
    %c-2048144789_i32_27 = arith.constant -2048144789 : i32
    %73 = vector.broadcast %c-2048144789_i32_27 : i32 to vector<8x256xi32>
    %74 = arith.muli %72, %73 : vector<8x256xi32>
    %c13_i32_28 = arith.constant 13 : i32
    %75 = vector.broadcast %c13_i32_28 : i32 to vector<8x256xi32>
    %76 = arith.shrsi %74, %75 : vector<8x256xi32>
    %c524287_i32_29 = arith.constant 524287 : i32
    %77 = vector.broadcast %c524287_i32_29 : i32 to vector<8x256xi32>
    %78 = arith.andi %76, %77 : vector<8x256xi32>
    %79 = arith.xori %74, %78 : vector<8x256xi32>
    %c-1028477387_i32_30 = arith.constant -1028477387 : i32
    %80 = vector.broadcast %c-1028477387_i32_30 : i32 to vector<8x256xi32>
    %81 = arith.muli %79, %80 : vector<8x256xi32>
    %c16_i32_31 = arith.constant 16 : i32
    %82 = vector.broadcast %c16_i32_31 : i32 to vector<8x256xi32>
    %83 = arith.shrsi %81, %82 : vector<8x256xi32>
    %c65535_i32_32 = arith.constant 65535 : i32
    %84 = vector.broadcast %c65535_i32_32 : i32 to vector<8x256xi32>
    %85 = arith.andi %83, %84 : vector<8x256xi32>
    %86 = arith.xori %81, %85 : vector<8x256xi32>
    %c8388607_i32 = arith.constant 8388607 : i32
    %87 = vector.broadcast %c8388607_i32 : i32 to vector<8x256xi32>
    %88 = arith.andi %65, %87 : vector<8x256xi32>
    %89 = arith.sitofp %88 : vector<8x256xi32> to vector<8x256xf32>
    %cst_33 = arith.constant 5.000000e-01 : f32
    %90 = vector.broadcast %cst_33 : f32 to vector<8x256xf32>
    %91 = arith.addf %89, %90 : vector<8x256xf32>
    %cst_34 = arith.constant 1.1920929E-7 : f32
    %92 = vector.broadcast %cst_34 : f32 to vector<8x256xf32>
    %93 = arith.mulf %91, %92 : vector<8x256xf32>
    %c8388607_i32_35 = arith.constant 8388607 : i32
    %94 = vector.broadcast %c8388607_i32_35 : i32 to vector<8x256xi32>
    %95 = arith.andi %86, %94 : vector<8x256xi32>
    %96 = arith.sitofp %95 : vector<8x256xi32> to vector<8x256xf32>
    %cst_36 = arith.constant 5.000000e-01 : f32
    %97 = vector.broadcast %cst_36 : f32 to vector<8x256xf32>
    %98 = arith.addf %96, %97 : vector<8x256xf32>
    %cst_37 = arith.constant 1.1920929E-7 : f32
    %99 = vector.broadcast %cst_37 : f32 to vector<8x256xf32>
    %100 = arith.mulf %98, %99 : vector<8x256xf32>
    %101 = math.log %93 : vector<8x256xf32>
    %cst_38 = arith.constant -2.000000e+00 : f32
    %102 = vector.broadcast %cst_38 : f32 to vector<8x256xf32>
    %103 = arith.mulf %102, %101 : vector<8x256xf32>
    %104 = math.sqrt %103 : vector<8x256xf32>
    %cst_39 = arith.constant 6.28318548 : f32
    %105 = vector.broadcast %cst_39 : f32 to vector<8x256xf32>
    %106 = arith.mulf %105, %100 : vector<8x256xf32>
    %107 = math.cos %106 : vector<8x256xf32>
    %108 = arith.mulf %104, %107 : vector<8x256xf32>
    %109 = math.sin %106 : vector<8x256xf32>
    %110 = arith.mulf %104, %109 : vector<8x256xf32>
    %111 = tpu.concatenate %108, %110 in 0 : vector<8x256xf32>, vector<8x256xf32> -> vector<16x256xf32>
    %112 = arith.mulf %20, %111 : vector<16x256xf32>
    %c0_40 = arith.constant 0 : index
    %c0_41 = arith.constant 0 : index
    %113 = vector.load %arg7[%c0_40, %c0_41] : memref<16x256xf32, #tpu.memory_space<vmem>>, vector<16x256xf32>
    tpu.vector_store %arg7[%c0_40, %c0_41], %112 {strides = array<i32>} : memref<16x256xf32, #tpu.memory_space<vmem>>, vector<16x256xf32>,
    %114 = arith.mulf %14, %16 : vector<16x256xf32>
    %115 = arith.addf %114, %112 : vector<16x256xf32>
    %c0_42 = arith.constant 0 : index
    %c0_43 = arith.constant 0 : index
    %116 = vector.load %arg6[%c0_42, %c0_43] : memref<16x256xf32, #tpu.memory_space<vmem>>, vector<16x256xf32>
    tpu.vector_store %arg6[%c0_42, %c0_43], %115 {strides = array<i32>} : memref<16x256xf32, #tpu.memory_space<vmem>>, vector<16x256xf32>,
    return
  }
  func.func @transform_0(%arg0: i32, %arg1: i32, %arg2: memref<1xi32, #tpu.memory_space<smem>>) -> (i32, i32, i32) {
    %c0_i32 = arith.constant 0 : i32
    %c0_i32_0 = arith.constant 0 : i32
    return %arg1, %arg0, %c0_i32 : i32, i32, i32
  }
  func.func @transform_1(%arg0: i32, %arg1: i32, %arg2: memref<1xi32, #tpu.memory_space<smem>>) -> (i32, i32) {
    %c0_i32 = arith.constant 0 : i32
    %c0_i32_0 = arith.constant 0 : i32
    %c0_i32_1 = arith.constant 0 : i32
    return %c0_i32, %c0_i32_0 : i32, i32
  }
  func.func @transform_2(%arg0: i32, %arg1: i32, %arg2: memref<1xi32, #tpu.memory_space<smem>>) -> (i32, i32) {
    %c0_i32 = arith.constant 0 : i32
    %c0_i32_0 = arith.constant 0 : i32
    %c0_i32_1 = arith.constant 0 : i32
    return %c0_i32, %c0_i32_0 : i32, i32
  }
  func.func @transform_3(%arg0: i32, %arg1: i32, %arg2: memref<1xi32, #tpu.memory_space<smem>>) -> (i32, i32) {
    %c0_i32 = arith.constant 0 : i32
    return %arg0, %arg1 : i32, i32
  }
  func.func @transform_4(%arg0: i32, %arg1: i32, %arg2: memref<1xi32, #tpu.memory_space<smem>>) -> (i32, i32) {
    %c0_i32 = arith.constant 0 : i32
    return %arg0, %arg1 : i32, i32
  }
}

</mosaic_0001>

<llo_original>
// kernel: tpu_custom_call.1
$region0: #{tpu_custom_call.1}
  #allocation0 [shape = 'u32[]', space=smem, size = 0x4, offset = 0x4, fixed_abs, tag = 'smem constant byte address 0x4 - core index']
  #allocation1 [shape = 'u32[144,128]{1,0:T(1,128)}', space=vmem, size = 0x12000, scoped, tag = 'internal scratch']
  #allocation2 [shape = 's32[1]{0}', space=sflag, size = 0x4, scoped, tag = 'scoped memory for tpu_custom_call.1']
  #allocation3 [shape = 's32[1]{0:T(128)S(6)}', space=smem, size = 0x200, scoped, tag = 'prefetched SMEM operand 0']
  %s0 = inlined_call_operand.<no memory space> [shape: s32[1], index: 0, kind: input, shape index: {}]
  %s1 = inlined_call_operand.hbm [shape: f32[1,16,24], index: 1, kind: input, shape index: {}]
  %s2 = inlined_call_operand.hbm [shape: f32[16,256], index: 2, kind: input, shape index: {}]
  %s3 = inlined_call_operand.hbm [shape: f32[8,256], index: 3, kind: input, shape index: {}]
  %s4 = inlined_call_operand.hbm [shape: f32[16,256], index: 4, kind: output, shape index: {0}]
  %s5 = inlined_call_operand.hbm [shape: f32[16,256], index: 5, kind: output, shape index: {1}]
  %6 = xla_tuple %s4, %s5
  %s7 = sld [smem:[#allocation0]]
  $region42: #{tpu_custom_call.1} parent=0
    _
  %s9 = ssub.s32 1, %s7
  %s10 = scalar_select 0, %s9, %s7
  %11 = sst [smem:[#allocation3]] %s0
  $region1: #{tpu_custom_call.1} parent=0
    #allocation4 [shape = 'u8[8192]{0}', space=vmem, size = 0x2000, scoped, tag = 'input window, operand 1, single buffered']
    #allocation5 [shape = 's32[1]{0}', space=sflag, size = 0x4, scoped, tag = 'scoped memory for tpu_custom_call.1']
    #allocation6 [shape = 's32[1]{0}', space=sflag, size = 0x4, scoped, tag = 'scoped memory for tpu_custom_call.1']
    #allocation7 [shape = 'u8[16384]{0}', space=vmem, size = 0x4000, scoped, tag = 'input window, operand 2, single buffered']
    #allocation8 [shape = 's32[1]{0}', space=sflag, size = 0x4, scoped, tag = 'scoped memory for tpu_custom_call.1']
    #allocation9 [shape = 'u8[8192]{0}', space=vmem, size = 0x2000, scoped, tag = 'input window, operand 3, single buffered']
    #allocation10 [shape = 'u8[16384]{0}', space=vmem, size = 0x4000, scoped, tag = 'output window, operand 0, single buffered']
    #allocation11 [shape = 'u8[16384]{0}', space=vmem, size = 0x4000, scoped, tag = 'output window, operand 1, single buffered']
    #allocation12 [shape = 's32[1]{0}', space=sflag, size = 0x4, scoped, tag = 'scoped memory for tpu_custom_call.1']
    %12 = vsyncpa [#allocation5], 0
    %13 = vsyncpa [#allocation8], 0
    %14 = vsyncpa [#allocation6], 0
    %15 = vsyncpa [#allocation12], 0
    // Predicated region
    $region2: #{tpu_custom_call.1} parent=1 // pred_check
      _
    $region3: #{tpu_custom_call.1} parent=1 // pred_check_branch
      %17 = sbr.rel (0) target = $region5
    $region4: #{tpu_custom_call.1} parent=1 // pred_region
      %s19 = ssub.s32 256, 256
      %20 = vsyncadd [#allocation5], %s19
      %s21 = sshll.u32 [#allocation4], 4
      %s22 = int_to_ptr.vmem [resolvable:$true] %s21
      %27 = dma.hbm_to_vmem [thread:$0]  %s1, 256, %s22, [#allocation5], 128, 128, 8
    $region5: #{tpu_custom_call.1} parent=1 // pred_fallthru
      _
    // Predicated region
    $region6: #{tpu_custom_call.1} parent=1 // pred_check
      _
    $region7: #{tpu_custom_call.1} parent=1 // pred_check_branch
      %29 = sbr.rel (0) target = $region9
    $region8: #{tpu_custom_call.1} parent=1 // pred_region
      %s31 = ssub.s32 512, 512
      %32 = vsyncadd [#allocation8], %s31
      %s33 = sshll.u32 [#allocation7], 4
      %s34 = int_to_ptr.vmem [resolvable:$true] %s33
      %39 = dma.hbm_to_vmem [thread:$0]  %s2, 512, %s34, [#allocation8], 256, 256, 16
    $region9: #{tpu_custom_call.1} parent=1 // pred_fallthru
      _
    // Predicated region
    $region10: #{tpu_custom_call.1} parent=1 // pred_check
      _
    $region11: #{tpu_custom_call.1} parent=1 // pred_check_branch
      %41 = sbr.rel (0) target = $region13
    $region12: #{tpu_custom_call.1} parent=1 // pred_region
      %s43 = ssub.s32 256, 256
      %44 = vsyncadd [#allocation8], %s43
      %s46 = sshll.u32 [#allocation9], 4
      %s47 = int_to_ptr.vmem [resolvable:$true] %s46
      %49 = dma.hbm_to_vmem [thread:$0]  %s3, 256, %s47, [#allocation8]
    $region13: #{tpu_custom_call.1} parent=1 // pred_fallthru
      _
    // Predicated region
    $region14: #{tpu_custom_call.1} parent=1 // pred_check
      _
    $region15: #{tpu_custom_call.1} parent=1 // pred_check_branch
      %51 = sbr.rel (0) target = $region17
    $region16: #{tpu_custom_call.1} parent=1 // pred_region
      %52 = dma.done [#allocation5], 256
    $region17: #{tpu_custom_call.1} parent=1 // pred_fallthru
      _
    // Predicated region
    $region18: #{tpu_custom_call.1} parent=1 // pred_check
      _
    $region19: #{tpu_custom_call.1} parent=1 // pred_check_branch
      %54 = sbr.rel (0) target = $region21
    $region20: #{tpu_custom_call.1} parent=1 // pred_region
      %55 = dma.done [#allocation8], 512
    $region21: #{tpu_custom_call.1} parent=1 // pred_fallthru
      _
    // Predicated region
    $region22: #{tpu_custom_call.1} parent=1 // pred_check
      _
    $region23: #{tpu_custom_call.1} parent=1 // pred_check_branch
      %57 = sbr.rel (0) target = $region25
    $region24: #{tpu_custom_call.1} parent=1 // pred_region
      %58 = dma.done [#allocation8], 256
    $region25: #{tpu_custom_call.1} parent=1 // pred_fallthru
      _
    %v59 = vld [vmem:[#allocation4] sm:$0xff]
    %v60 = vld [vmem:[#allocation4 + $0x8] sm:$0xff]
    %v61 = vld [vmem:[#allocation7] sm:$0xff]
    %v62 = vld [vmem:[#allocation7 + $0x8] sm:$0xff]
    %v63 = vld [vmem:[#allocation7 + $0x10] sm:$0xff]
    %v64 = vld [vmem:[#allocation7 + $0x18] sm:$0xff]
    %vm65 = vcmask 130048
    %v67 = vsel %vm65, %v59, 0
    %v70 = vsel %vm65, %v60, 0
    %v72 = vand.u32 %v62, 4294901760
    %73 = vmatprep.subr.mxu0 %v72
    %v74 = vand.u32 %v61, 4294901760
    %75 = vmatpush1.msra.mxu0 %v74
    %v76 = vand.u32 %v64, 4294901760
    %77 = vmatprep.subr.mxu0 %v76
    %v78 = vand.u32 %v63, 4294901760
    %79 = vmatpush1.msra.mxu0 %v78
    %80 = vmatprep.subr.mxu0 0.0
    %81 = vmatpush1.msra.mxu0 0.0
    %82 = vmatprep.subr.mxu0 0.0
    %83 = vmatpush1.msra.mxu0 0.0
    %84 = vmatprep.subr.mxu0 0.0
    %85 = vmatpush1.msra.mxu0 0.0
    %86 = vmatprep.subr.mxu0 0.0
    %87 = vmatpush1.msra.mxu0 0.0
    %88 = vmatprep.subr.mxu0 0.0
    %89 = vmatpush1.msra.mxu0 0.0
    %90 = vmatprep.subr.mxu0 0.0
    %91 = vmatpush1.msra.mxu0 0.0
    %92 = vmatprep.subr.mxu0 0.0
    %93 = vmatpush1.msra.mxu0 0.0
    %94 = vmatprep.subr.mxu0 0.0
    %95 = vmatpush1.msra.mxu0 0.0
    %96 = vmatprep.subr.mxu0 0.0
    %97 = vmatpush1.msra.mxu0 0.0
    %98 = vmatprep.subr.mxu0 0.0
    %99 = vmatpush1.msra.mxu0 0.0
    %100 = vmatprep.subr.mxu0 0.0
    %101 = vmatpush1.msra.mxu0 0.0
    %102 = vmatprep.subr.mxu0 0.0
    %103 = vmatpush1.msra.mxu0 0.0
    %104 = vmatprep.subr.mxu0 0.0
    %105 = vmatpush1.msra.mxu0 0.0
    %106 = vmatprep.subr.mxu0 0.0
    %107 = vmatpush1.msra.mxu0 0.0
    %108 = vmatprep.subr.mxu0 0.0
    %109 = vmatpush1.msra.mxu0 0.0
    %110 = vmatprep.subr.mxu0 0.0
    %111 = vmatpush1.msra.mxu0 0.0
    %112 = vmatprep.subr.mxu0 0.0
    %113 = vmatpush1.msra.mxu0 0.0
    %114 = vmatprep.subr.mxu0 0.0
    %115 = vmatpush1.msra.mxu0 0.0
    %116 = vmatprep.subr.mxu0 0.0
    %117 = vmatpush1.msra.mxu0 0.0
    %118 = vmatprep.subr.mxu0 0.0
    %119 = vmatpush1.msra.mxu0 0.0
    %120 = vmatprep.subr.mxu0 0.0
    %121 = vmatpush1.msra.mxu0 0.0
    %122 = vmatprep.subr.mxu0 0.0
    %123 = vmatpush1.msra.mxu0 0.0
    %124 = vmatprep.subr.mxu0 0.0
    %125 = vmatpush1.msra.mxu0 0.0
    %126 = vmatprep.subr.mxu0 0.0
    %127 = vmatpush1.msra.mxu0 0.0
    %128 = vmatprep.subr.mxu0 0.0
    %129 = vmatpush1.msra.mxu0 0.0
    %130 = vmatprep.subr.mxu0 0.0
    %131 = vmatpush1.msra.mxu0 0.0
    %132 = vmatprep.subr.mxu0 0.0
    %133 = vmatpush1.msra.mxu0 0.0
    %134 = vmatprep.subr.mxu0 0.0
    %135 = vmatpush1.msra.mxu0 0.0
    %136 = vmatprep.subr.mxu0 0.0
    %137 = vmatpush1.msra.mxu0 0.0
    %138 = vmatprep.subr.mxu0 0.0
    %139 = vmatpush1.msra.mxu0 0.0
    %140 = vmatprep.mubr.f32.mxu0 0.0
    %v141 = vand.u32 %v67, 4294901760
    %v142 = vsub.f32 %v67, %v141
    %v143 = vand.u32 %v142, 4294901760
    %v144 = vsub.f32 %v142, %v143
    %v145 = vand.u32 %v144, 4294901760
    %146 = vmatmul.mubr.f32.gmra.mrb[0].mxu0 %v145
    %v147 = vpop.f32.mrb[0].mxu0
    %v148 = vadd.f32 0.0, %v147
    %v149 = vpop.f32.mrb[0].mxu0
    %v150 = vadd.f32 0.0, %v149
    %151 = vmatprep.mubr.f32.mxu0 0.0
    %v152 = vand.u32 %v70, 4294901760
    %v153 = vsub.f32 %v70, %v152
    %v154 = vand.u32 %v153, 4294901760
    %v155 = vsub.f32 %v153, %v154
    %v156 = vand.u32 %v155, 4294901760
    %157 = vmatmul.mubr.f32.gmra.mrb[0].mxu0 %v156
    %v158 = vpop.f32.mrb[0].mxu0
    %v159 = vadd.f32 0.0, %v158
    %v160 = vpop.f32.mrb[0].mxu0
    %v161 = vadd.f32 0.0, %v160
    %162 = vdwg.mxu0
    %v163 = vand.u32 %v62, 4294901760
    %v164 = vsub.f32 %v62, %v163
    %v165 = vand.u32 %v164, 4294901760
    %v166 = vsub.f32 %v164, %v165
    %v167 = vand.u32 %v166, 4294901760
    %168 = vmatprep.subr.mxu0 %v167
    %v169 = vand.u32 %v61, 4294901760
    %v170 = vsub.f32 %v61, %v169
    %v171 = vand.u32 %v170, 4294901760
    %v172 = vsub.f32 %v170, %v171
    %v173 = vand.u32 %v172, 4294901760
    %174 = vmatpush1.msra.mxu0 %v173
    %v175 = vand.u32 %v64, 4294901760
    %v176 = vsub.f32 %v64, %v175
    %v177 = vand.u32 %v176, 4294901760
    %v178 = vsub.f32 %v176, %v177
    %v179 = vand.u32 %v178, 4294901760
    %180 = vmatprep.subr.mxu0 %v179
    %v181 = vand.u32 %v63, 4294901760
    %v182 = vsub.f32 %v63, %v181
    %v183 = vand.u32 %v182, 4294901760
    %v184 = vsub.f32 %v182, %v183
    %v185 = vand.u32 %v184, 4294901760
    %186 = vmatpush1.msra.mxu0 %v185
    %187 = vmatprep.subr.mxu0 0.0
    %188 = vmatpush1.msra.mxu0 0.0
    %189 = vmatprep.subr.mxu0 0.0
    %190 = vmatpush1.msra.mxu0 0.0
    %191 = vmatprep.subr.mxu0 0.0
    %192 = vmatpush1.msra.mxu0 0.0
    %193 = vmatprep.subr.mxu0 0.0
    %194 = vmatpush1.msra.mxu0 0.0
    %195 = vmatprep.subr.mxu0 0.0
    %196 = vmatpush1.msra.mxu0 0.0
    %197 = vmatprep.subr.mxu0 0.0
    %198 = vmatpush1.msra.mxu0 0.0
    %199 = vmatprep.subr.mxu0 0.0
    %200 = vmatpush1.msra.mxu0 0.0
    %201 = vmatprep.subr.mxu0 0.0
    %202 = vmatpush1.msra.mxu0 0.0
    %203 = vmatprep.subr.mxu0 0.0
    %204 = vmatpush1.msra.mxu0 0.0
    %205 = vmatprep.subr.mxu0 0.0
    %206 = vmatpush1.msra.mxu0 0.0
    %207 = vmatprep.subr.mxu0 0.0
    %208 = vmatpush1.msra.mxu0 0.0
    %209 = vmatprep.subr.mxu0 0.0
    %210 = vmatpush1.msra.mxu0 0.0
    %211 = vmatprep.subr.mxu0 0.0
    %212 = vmatpush1.msra.mxu0 0.0
    %213 = vmatprep.subr.mxu0 0.0
    %214 = vmatpush1.msra.mxu0 0.0
    %215 = vmatprep.subr.mxu0 0.0
    %216 = vmatpush1.msra.mxu0 0.0
    %217 = vmatprep.subr.mxu0 0.0
    %218 = vmatpush1.msra.mxu0 0.0
    %219 = vmatprep.subr.mxu0 0.0
    %220 = vmatpush1.msra.mxu0 0.0
    %221 = vmatprep.subr.mxu0 0.0
    %222 = vmatpush1.msra.mxu0 0.0
    %223 = vmatprep.subr.mxu0 0.0
    %224 = vmatpush1.msra.mxu0 0.0
    %225 = vmatprep.subr.mxu0 0.0
    %226 = vmatpush1.msra.mxu0 0.0
    %227 = vmatprep.subr.mxu0 0.0
    %228 = vmatpush1.msra.mxu0 0.0
    %229 = vmatprep.subr.mxu0 0.0
    %230 = vmatpush1.msra.mxu0 0.0
    %231 = vmatprep.subr.mxu0 0.0
    %232 = vmatpush1.msra.mxu0 0.0
    %233 = vmatprep.subr.mxu0 0.0
    %234 = vmatpush1.msra.mxu0 0.0
    %235 = vmatprep.subr.mxu0 0.0
    %236 = vmatpush1.msra.mxu0 0.0
    %237 = vmatprep.subr.mxu0 0.0
    %238 = vmatpush1.msra.mxu0 0.0
    %239 = vmatprep.subr.mxu0 0.0
    %240 = vmatpush1.msra.mxu0 0.0
    %241 = vmatprep.subr.mxu0 0.0
    %242 = vmatpush1.msra.mxu0 0.0
    %243 = vmatprep.subr.mxu0 0.0
    %244 = vmatpush1.msra.mxu0 0.0
    %245 = vmatprep.subr.mxu0 0.0
    %246 = vmatpush1.msra.mxu0 0.0
    %247 = vmatprep.mubr.f32.mxu0 0.0
    %v248 = vand.u32 %v67, 4294901760
    %249 = vmatmul.mubr.f32.gmra.mrb[0].mxu0 %v248
    %v250 = vpop.f32.mrb[0].mxu0
    %v251 = vadd.f32 %v148, %v250
    %v252 = vpop.f32.mrb[0].mxu0
    %v253 = vadd.f32 %v150, %v252
    %254 = vmatprep.mubr.f32.mxu0 0.0
    %v255 = vand.u32 %v70, 4294901760
    %256 = vmatmul.mubr.f32.gmra.mrb[0].mxu0 %v255
    %v257 = vpop.f32.mrb[0].mxu0
    %v258 = vadd.f32 %v159, %v257
    %v259 = vpop.f32.mrb[0].mxu0
    %v260 = vadd.f32 %v161, %v259
    %261 = vdwg.mxu0
    %v262 = vand.u32 %v62, 4294901760
    %v263 = vsub.f32 %v62, %v262
    %264 = vmatprep.subr.mxu0 %v263
    %v265 = vand.u32 %v61, 4294901760
    %v266 = vsub.f32 %v61, %v265
    %267 = vmatpush1.msra.mxu0 %v266
    %v268 = vand.u32 %v64, 4294901760
    %v269 = vsub.f32 %v64, %v268
    %270 = vmatprep.subr.mxu0 %v269
    %v271 = vand.u32 %v63, 4294901760
    %v272 = vsub.f32 %v63, %v271
    %273 = vmatpush1.msra.mxu0 %v272
    %274 = vmatprep.subr.mxu0 0.0
    %275 = vmatpush1.msra.mxu0 0.0
    %276 = vmatprep.subr.mxu0 0.0
    %277 = vmatpush1.msra.mxu0 0.0
    %278 = vmatprep.subr.mxu0 0.0
    %279 = vmatpush1.msra.mxu0 0.0
    %280 = vmatprep.subr.mxu0 0.0
    %281 = vmatpush1.msra.mxu0 0.0
    %282 = vmatprep.subr.mxu0 0.0
    %283 = vmatpush1.msra.mxu0 0.0
    %284 = vmatprep.subr.mxu0 0.0
    %285 = vmatpush1.msra.mxu0 0.0
    %286 = vmatprep.subr.mxu0 0.0
    %287 = vmatpush1.msra.mxu0 0.0
    %288 = vmatprep.subr.mxu0 0.0
    %289 = vmatpush1.msra.mxu0 0.0
    %290 = vmatprep.subr.mxu0 0.0
    %291 = vmatpush1.msra.mxu0 0.0
    %292 = vmatprep.subr.mxu0 0.0
    %293 = vmatpush1.msra.mxu0 0.0
    %294 = vmatprep.subr.mxu0 0.0
    %295 = vmatpush1.msra.mxu0 0.0
    %296 = vmatprep.subr.mxu0 0.0
    %297 = vmatpush1.msra.mxu0 0.0
    %298 = vmatprep.subr.mxu0 0.0
    %299 = vmatpush1.msra.mxu0 0.0
    %300 = vmatprep.subr.mxu0 0.0
    %301 = vmatpush1.msra.mxu0 0.0
    %302 = vmatprep.subr.mxu0 0.0
    %303 = vmatpush1.msra.mxu0 0.0
    %304 = vmatprep.subr.mxu0 0.0
    %305 = vmatpush1.msra.mxu0 0.0
    %306 = vmatprep.subr.mxu0 0.0
    %307 = vmatpush1.msra.mxu0 0.0
    %308 = vmatprep.subr.mxu0 0.0
    %309 = vmatpush1.msra.mxu0 0.0
    %310 = vmatprep.subr.mxu0 0.0
    %311 = vmatpush1.msra.mxu0 0.0
    %312 = vmatprep.subr.mxu0 0.0
    %313 = vmatpush1.msra.mxu0 0.0
    %314 = vmatprep.subr.mxu0 0.0
    %315 = vmatpush1.msra.mxu0 0.0
    %316 = vmatprep.subr.mxu0 0.0
    %317 = vmatpush1.msra.mxu0 0.0
    %318 = vmatprep.subr.mxu0 0.0
    %319 = vmatpush1.msra.mxu0 0.0
    %320 = vmatprep.subr.mxu0 0.0
    %321 = vmatpush1.msra.mxu0 0.0
    %322 = vmatprep.subr.mxu0 0.0
    %323 = vmatpush1.msra.mxu0 0.0
    %324 = vmatprep.subr.mxu0 0.0
    %325 = vmatpush1.msra.mxu0 0.0
    %326 = vmatprep.subr.mxu0 0.0
    %327 = vmatpush1.msra.mxu0 0.0
    %328 = vmatprep.subr.mxu0 0.0
    %329 = vmatpush1.msra.mxu0 0.0
    %330 = vmatprep.subr.mxu0 0.0
    %331 = vmatpush1.msra.mxu0 0.0
    %332 = vmatprep.subr.mxu0 0.0
    %333 = vmatpush1.msra.mxu0 0.0
    %334 = vmatprep.mubr.f32.mxu0 0.0
    %v335 = vand.u32 %v67, 4294901760
    %v336 = vsub.f32 %v67, %v335
    %337 = vmatmul.mubr.f32.gmra.mrb[0].mxu0 %v336
    %v338 = vpop.f32.mrb[0].mxu0
    %v339 = vadd.f32 %v251, %v338
    %v340 = vpop.f32.mrb[0].mxu0
    %v341 = vadd.f32 %v253, %v340
    %342 = vmatprep.mubr.f32.mxu0 0.0
    %v343 = vand.u32 %v70, 4294901760
    %v344 = vsub.f32 %v70, %v343
    %345 = vmatmul.mubr.f32.gmra.mrb[0].mxu0 %v344
    %v346 = vpop.f32.mrb[0].mxu0
    %v347 = vadd.f32 %v258, %v346
    %v348 = vpop.f32.mrb[0].mxu0
    %v349 = vadd.f32 %v260, %v348
    %350 = vdwg.mxu0
    %v351 = vand.u32 %v62, 4294901760
    %352 = vmatprep.subr.mxu0 %v351
    %v353 = vand.u32 %v61, 4294901760
    %354 = vmatpush1.msra.mxu0 %v353
    %v355 = vand.u32 %v64, 4294901760
    %356 = vmatprep.subr.mxu0 %v355
    %v357 = vand.u32 %v63, 4294901760
    %358 = vmatpush1.msra.mxu0 %v357
    %359 = vmatprep.subr.mxu0 0.0
    %360 = vmatpush1.msra.mxu0 0.0
    %361 = vmatprep.subr.mxu0 0.0
    %362 = vmatpush1.msra.mxu0 0.0
    %363 = vmatprep.subr.mxu0 0.0
    %364 = vmatpush1.msra.mxu0 0.0
    %365 = vmatprep.subr.mxu0 0.0
    %366 = vmatpush1.msra.mxu0 0.0
    %367 = vmatprep.subr.mxu0 0.0
    %368 = vmatpush1.msra.mxu0 0.0
    %369 = vmatprep.subr.mxu0 0.0
    %370 = vmatpush1.msra.mxu0 0.0
    %371 = vmatprep.subr.mxu0 0.0
    %372 = vmatpush1.msra.mxu0 0.0
    %373 = vmatprep.subr.mxu0 0.0
    %374 = vmatpush1.msra.mxu0 0.0
    %375 = vmatprep.subr.mxu0 0.0
    %376 = vmatpush1.msra.mxu0 0.0
    %377 = vmatprep.subr.mxu0 0.0
    %378 = vmatpush1.msra.mxu0 0.0
    %379 = vmatprep.subr.mxu0 0.0
    %380 = vmatpush1.msra.mxu0 0.0
    %381 = vmatprep.subr.mxu0 0.0
    %382 = vmatpush1.msra.mxu0 0.0
    %383 = vmatprep.subr.mxu0 0.0
    %384 = vmatpush1.msra.mxu0 0.0
    %385 = vmatprep.subr.mxu0 0.0
    %386 = vmatpush1.msra.mxu0 0.0
    %387 = vmatprep.subr.mxu0 0.0
    %388 = vmatpush1.msra.mxu0 0.0
    %389 = vmatprep.subr.mxu0 0.0
    %390 = vmatpush1.msra.mxu0 0.0
    %391 = vmatprep.subr.mxu0 0.0
    %392 = vmatpush1.msra.mxu0 0.0
    %393 = vmatprep.subr.mxu0 0.0
    %394 = vmatpush1.msra.mxu0 0.0
    %395 = vmatprep.subr.mxu0 0.0
    %396 = vmatpush1.msra.mxu0 0.0
    %397 = vmatprep.subr.mxu0 0.0
    %398 = vmatpush1.msra.mxu0 0.0
    %399 = vmatprep.subr.mxu0 0.0
    %400 = vmatpush1.msra.mxu0 0.0
    %401 = vmatprep.subr.mxu0 0.0
    %402 = vmatpush1.msra.mxu0 0.0
    %403 = vmatprep.subr.mxu0 0.0
    %404 = vmatpush1.msra.mxu0 0.0
    %405 = vmatprep.subr.mxu0 0.0
    %406 = vmatpush1.msra.mxu0 0.0
    %407 = vmatprep.subr.mxu0 0.0
    %408 = vmatpush1.msra.mxu0 0.0
    %409 = vmatprep.subr.mxu0 0.0
    %410 = vmatpush1.msra.mxu0 0.0
    %411 = vmatprep.subr.mxu0 0.0
    %412 = vmatpush1.msra.mxu0 0.0
    %413 = vmatprep.subr.mxu0 0.0
    %414 = vmatpush1.msra.mxu0 0.0
    %415 = vmatprep.subr.mxu0 0.0
    %416 = vmatpush1.msra.mxu0 0.0
    %417 = vmatprep.subr.mxu0 0.0
    %418 = vmatpush1.msra.mxu0 0.0
    %419 = vmatprep.mubr.f32.mxu0 0.0
    %v420 = vand.u32 %v67, 4294901760
    %v421 = vsub.f32 %v67, %v420
    %v422 = vand.u32 %v421, 4294901760
    %423 = vmatmul.mubr.f32.gmra.mrb[0].mxu0 %v422
    %v424 = vpop.f32.mrb[0].mxu0
    %v425 = vadd.f32 %v339, %v424
    %v426 = vpop.f32.mrb[0].mxu0
    %v427 = vadd.f32 %v341, %v426
    %428 = vmatprep.mubr.f32.mxu0 0.0
    %v429 = vand.u32 %v70, 4294901760
    %v430 = vsub.f32 %v70, %v429
    %v431 = vand.u32 %v430, 4294901760
    %432 = vmatmul.mubr.f32.gmra.mrb[0].mxu0 %v431
    %v433 = vpop.f32.mrb[0].mxu0
    %v434 = vadd.f32 %v347, %v433
    %v435 = vpop.f32.mrb[0].mxu0
    %v436 = vadd.f32 %v349, %v435
    %437 = vdwg.mxu0
    %v438 = vand.u32 %v62, 4294901760
    %v439 = vsub.f32 %v62, %v438
    %v440 = vand.u32 %v439, 4294901760
    %441 = vmatprep.subr.mxu0 %v440
    %v442 = vand.u32 %v61, 4294901760
    %v443 = vsub.f32 %v61, %v442
    %v444 = vand.u32 %v443, 4294901760
    %445 = vmatpush1.msra.mxu0 %v444
    %v446 = vand.u32 %v64, 4294901760
    %v447 = vsub.f32 %v64, %v446
    %v448 = vand.u32 %v447, 4294901760
    %449 = vmatprep.subr.mxu0 %v448
    %v450 = vand.u32 %v63, 4294901760
    %v451 = vsub.f32 %v63, %v450
    %v452 = vand.u32 %v451, 4294901760
    %453 = vmatpush1.msra.mxu0 %v452
    %454 = vmatprep.subr.mxu0 0.0
    %455 = vmatpush1.msra.mxu0 0.0
    %456 = vmatprep.subr.mxu0 0.0
    %457 = vmatpush1.msra.mxu0 0.0
    %458 = vmatprep.subr.mxu0 0.0
    %459 = vmatpush1.msra.mxu0 0.0
    %460 = vmatprep.subr.mxu0 0.0
    %461 = vmatpush1.msra.mxu0 0.0
    %462 = vmatprep.subr.mxu0 0.0
    %463 = vmatpush1.msra.mxu0 0.0
    %464 = vmatprep.subr.mxu0 0.0
    %465 = vmatpush1.msra.mxu0 0.0
    %466 = vmatprep.subr.mxu0 0.0
    %467 = vmatpush1.msra.mxu0 0.0
    %468 = vmatprep.subr.mxu0 0.0
    %469 = vmatpush1.msra.mxu0 0.0
    %470 = vmatprep.subr.mxu0 0.0
    %471 = vmatpush1.msra.mxu0 0.0
    %472 = vmatprep.subr.mxu0 0.0
    %473 = vmatpush1.msra.mxu0 0.0
    %474 = vmatprep.subr.mxu0 0.0
    %475 = vmatpush1.msra.mxu0 0.0
    %476 = vmatprep.subr.mxu0 0.0
    %477 = vmatpush1.msra.mxu0 0.0
    %478 = vmatprep.subr.mxu0 0.0
    %479 = vmatpush1.msra.mxu0 0.0
    %480 = vmatprep.subr.mxu0 0.0
    %481 = vmatpush1.msra.mxu0 0.0
    %482 = vmatprep.subr.mxu0 0.0
    %483 = vmatpush1.msra.mxu0 0.0
    %484 = vmatprep.subr.mxu0 0.0
    %485 = vmatpush1.msra.mxu0 0.0
    %486 = vmatprep.subr.mxu0 0.0
    %487 = vmatpush1.msra.mxu0 0.0
    %488 = vmatprep.subr.mxu0 0.0
    %489 = vmatpush1.msra.mxu0 0.0
    %490 = vmatprep.subr.mxu0 0.0
    %491 = vmatpush1.msra.mxu0 0.0
    %492 = vmatprep.subr.mxu0 0.0
    %493 = vmatpush1.msra.mxu0 0.0
    %494 = vmatprep.subr.mxu0 0.0
    %495 = vmatpush1.msra.mxu0 0.0
    %496 = vmatprep.subr.mxu0 0.0
    %497 = vmatpush1.msra.mxu0 0.0
    %498 = vmatprep.subr.mxu0 0.0
    %499 = vmatpush1.msra.mxu0 0.0
    %500 = vmatprep.subr.mxu0 0.0
    %501 = vmatpush1.msra.mxu0 0.0
    %502 = vmatprep.subr.mxu0 0.0
    %503 = vmatpush1.msra.mxu0 0.0
    %504 = vmatprep.subr.mxu0 0.0
    %505 = vmatpush1.msra.mxu0 0.0
    %506 = vmatprep.subr.mxu0 0.0
    %507 = vmatpush1.msra.mxu0 0.0
    %508 = vmatprep.subr.mxu0 0.0
    %509 = vmatpush1.msra.mxu0 0.0
    %510 = vmatprep.subr.mxu0 0.0
    %511 = vmatpush1.msra.mxu0 0.0
    %512 = vmatprep.subr.mxu0 0.0
    %513 = vmatpush1.msra.mxu0 0.0
    %514 = vmatprep.mubr.f32.mxu0 0.0
    %v515 = vand.u32 %v67, 4294901760
    %516 = vmatmul.mubr.f32.gmra.mrb[0].mxu0 %v515
    %v517 = vpop.f32.mrb[0].mxu0
    %v518 = vadd.f32 %v425, %v517
    %v519 = vpop.f32.mrb[0].mxu0
    %v520 = vadd.f32 %v427, %v519
    %521 = vmatprep.mubr.f32.mxu0 0.0
    %v522 = vand.u32 %v70, 4294901760
    %523 = vmatmul.mubr.f32.gmra.mrb[0].mxu0 %v522
    %v524 = vpop.f32.mrb[0].mxu0
    %v525 = vadd.f32 %v434, %v524
    %v526 = vpop.f32.mrb[0].mxu0
    %v527 = vadd.f32 %v436, %v526
    %528 = vdwg.mxu0
    %v529 = vand.u32 %v62, 4294901760
    %530 = vmatprep.subr.mxu0 %v529
    %v531 = vand.u32 %v61, 4294901760
    %532 = vmatpush1.msra.mxu0 %v531
    %v533 = vand.u32 %v64, 4294901760
    %534 = vmatprep.subr.mxu0 %v533
    %v535 = vand.u32 %v63, 4294901760
    %536 = vmatpush1.msra.mxu0 %v535
    %537 = vmatprep.subr.mxu0 0.0
    %538 = vmatpush1.msra.mxu0 0.0
    %539 = vmatprep.subr.mxu0 0.0
    %540 = vmatpush1.msra.mxu0 0.0
    %541 = vmatprep.subr.mxu0 0.0
    %542 = vmatpush1.msra.mxu0 0.0
    %543 = vmatprep.subr.mxu0 0.0
    %544 = vmatpush1.msra.mxu0 0.0
    %545 = vmatprep.subr.mxu0 0.0
    %546 = vmatpush1.msra.mxu0 0.0
    %547 = vmatprep.subr.mxu0 0.0
    %548 = vmatpush1.msra.mxu0 0.0
    %549 = vmatprep.subr.mxu0 0.0
    %550 = vmatpush1.msra.mxu0 0.0
    %551 = vmatprep.subr.mxu0 0.0
    %552 = vmatpush1.msra.mxu0 0.0
    %553 = vmatprep.subr.mxu0 0.0
    %554 = vmatpush1.msra.mxu0 0.0
    %555 = vmatprep.subr.mxu0 0.0
    %556 = vmatpush1.msra.mxu0 0.0
    %557 = vmatprep.subr.mxu0 0.0
    %558 = vmatpush1.msra.mxu0 0.0
    %559 = vmatprep.subr.mxu0 0.0
    %560 = vmatpush1.msra.mxu0 0.0
    %561 = vmatprep.subr.mxu0 0.0
    %562 = vmatpush1.msra.mxu0 0.0
    %563 = vmatprep.subr.mxu0 0.0
    %564 = vmatpush1.msra.mxu0 0.0
    %565 = vmatprep.subr.mxu0 0.0
    %566 = vmatpush1.msra.mxu0 0.0
    %567 = vmatprep.subr.mxu0 0.0
    %568 = vmatpush1.msra.mxu0 0.0
    %569 = vmatprep.subr.mxu0 0.0
    %570 = vmatpush1.msra.mxu0 0.0
    %571 = vmatprep.subr.mxu0 0.0
    %572 = vmatpush1.msra.mxu0 0.0
    %573 = vmatprep.subr.mxu0 0.0
    %574 = vmatpush1.msra.mxu0 0.0
    %575 = vmatprep.subr.mxu0 0.0
    %576 = vmatpush1.msra.mxu0 0.0
    %577 = vmatprep.subr.mxu0 0.0
    %578 = vmatpush1.msra.mxu0 0.0
    %579 = vmatprep.subr.mxu0 0.0
    %580 = vmatpush1.msra.mxu0 0.0
    %581 = vmatprep.subr.mxu0 0.0
    %582 = vmatpush1.msra.mxu0 0.0
    %583 = vmatprep.subr.mxu0 0.0
    %584 = vmatpush1.msra.mxu0 0.0
    %585 = vmatprep.subr.mxu0 0.0
    %586 = vmatpush1.msra.mxu0 0.0
    %587 = vmatprep.subr.mxu0 0.0
    %588 = vmatpush1.msra.mxu0 0.0
    %589 = vmatprep.subr.mxu0 0.0
    %590 = vmatpush1.msra.mxu0 0.0
    %591 = vmatprep.subr.mxu0 0.0
    %592 = vmatpush1.msra.mxu0 0.0
    %593 = vmatprep.subr.mxu0 0.0
    %594 = vmatpush1.msra.mxu0 0.0
    %595 = vmatprep.subr.mxu0 0.0
    %596 = vmatpush1.msra.mxu0 0.0
    %597 = vmatprep.mubr.f32.mxu0 0.0
    %v598 = vand.u32 %v67, 4294901760
    %599 = vmatmul.mubr.f32.gmra.mrb[0].mxu0 %v598
    %v600 = vpop.f32.mrb[0].mxu0
    %v601 = vadd.f32 %v518, %v600
    %v602 = vpop.f32.mrb[0].mxu0
    %v603 = vadd.f32 %v520, %v602
    %604 = vmatprep.mubr.f32.mxu0 0.0
    %v605 = vand.u32 %v70, 4294901760
    %606 = vmatmul.mubr.f32.gmra.mrb[0].mxu0 %v605
    %v607 = vpop.f32.mrb[0].mxu0
    %v608 = vadd.f32 %v525, %v607
    %v609 = vpop.f32.mrb[0].mxu0
    %v610 = vadd.f32 %v527, %v609
    %611 = vdwg.mxu0
    %v612 = vld [vmem:[#allocation9] sm:$0xff]
    %v613 = vld [vmem:[#allocation9 + $0x8] sm:$0xff]
    %614 = vrot.lane.b32.xlu0 %v59, 112
    %v615 = vpop.permute.xlu0 %614
    %616 = vrot.lane.b32.xlu0 %v60, 112
    %v617 = vpop.permute.xlu0 %616
    %vm618 = vcmask 64512
    %v619 = vsel %vm618, %v615, 0
    %v621 = vsel %vm618, %v617, 0
    %623 = vmatprep.subr.mxu0 %v613
    %624 = vmatpush1.msra.mxu0 %v612
    %625 = vmatprep.subr.mxu0 0.0
    %626 = vmatpush1.msra.mxu0 0.0
    %627 = vmatprep.subr.mxu0 0.0
    %628 = vmatpush1.msra.mxu0 0.0
    %629 = vmatprep.subr.mxu0 0.0
    %630 = vmatpush1.msra.mxu0 0.0
    %631 = vmatprep.subr.mxu0 0.0
    %632 = vmatpush1.msra.mxu0 0.0
    %633 = vmatprep.subr.mxu0 0.0
    %634 = vmatpush1.msra.mxu0 0.0
    %635 = vmatprep.subr.mxu0 0.0
    %636 = vmatpush1.msra.mxu0 0.0
    %637 = vmatprep.subr.mxu0 0.0
    %638 = vmatpush1.msra.mxu0 0.0
    %639 = vmatprep.subr.mxu0 0.0
    %640 = vmatpush1.msra.mxu0 0.0
    %641 = vmatprep.subr.mxu0 0.0
    %642 = vmatpush1.msra.mxu0 0.0
    %643 = vmatprep.subr.mxu0 0.0
    %644 = vmatpush1.msra.mxu0 0.0
    %645 = vmatprep.subr.mxu0 0.0
    %646 = vmatpush1.msra.mxu0 0.0
    %647 = vmatprep.subr.mxu0 0.0
    %648 = vmatpush1.msra.mxu0 0.0
    %649 = vmatprep.subr.mxu0 0.0
    %650 = vmatpush1.msra.mxu0 0.0
    %651 = vmatprep.subr.mxu0 0.0
    %652 = vmatpush1.msra.mxu0 0.0
    %653 = vmatprep.subr.mxu0 0.0
    %654 = vmatpush1.msra.mxu0 0.0
    %655 = vmatprep.subr.mxu0 0.0
    %656 = vmatpush1.msra.mxu0 0.0
    %657 = vmatprep.subr.mxu0 0.0
    %658 = vmatpush1.msra.mxu0 0.0
    %659 = vmatprep.subr.mxu0 0.0
    %660 = vmatpush1.msra.mxu0 0.0
    %661 = vmatprep.subr.mxu0 0.0
    %662 = vmatpush1.msra.mxu0 0.0
    %663 = vmatprep.subr.mxu0 0.0
    %664 = vmatpush1.msra.mxu0 0.0
    %665 = vmatprep.subr.mxu0 0.0
    %666 = vmatpush1.msra.mxu0 0.0
    %667 = vmatprep.subr.mxu0 0.0
    %668 = vmatpush1.msra.mxu0 0.0
    %669 = vmatprep.subr.mxu0 0.0
    %670 = vmatpush1.msra.mxu0 0.0
    %671 = vmatprep.subr.mxu0 0.0
    %672 = vmatpush1.msra.mxu0 0.0
    %673 = vmatprep.subr.mxu0 0.0
    %674 = vmatpush1.msra.mxu0 0.0
    %675 = vmatprep.subr.mxu0 0.0
    %676 = vmatpush1.msra.mxu0 0.0
    %677 = vmatprep.subr.mxu0 0.0
    %678 = vmatpush1.msra.mxu0 0.0
    %679 = vmatprep.subr.mxu0 0.0
    %680 = vmatpush1.msra.mxu0 0.0
    %681 = vmatprep.subr.mxu0 0.0
    %682 = vmatpush1.msra.mxu0 0.0
    %683 = vmatprep.subr.mxu0 0.0
    %684 = vmatpush1.msra.mxu0 0.0
    %685 = vmatprep.subr.mxu0 0.0
    %686 = vmatpush1.msra.mxu0 0.0
    %687 = vmatprep.mubr.f32.mxu0 0.0
    %688 = vmatmul.mubr.f32.gmra.mrb[0].mxu0 %v619
    %v689 = vpop.f32.mrb[0].mxu0
    %v690 = vadd.f32 0.0, %v689
    %v691 = vpop.f32.mrb[0].mxu0
    %v692 = vadd.f32 0.0, %v691
    %693 = vmatprep.mubr.f32.mxu0 0.0
    %694 = vmatmul.mubr.f32.gmra.mrb[0].mxu0 %v621
    %v695 = vpop.f32.mrb[0].mxu0
    %v696 = vadd.f32 0.0, %v695
    %v697 = vpop.f32.mrb[0].mxu0
    %v698 = vadd.f32 0.0, %v697
    %699 = vdwg.mxu0
    %v700 = vmul.f32 %v601, 0.15915494
    %v701 = vmul.f32 %v603, 0.15915494
    %v702 = vmul.f32 %v608, 0.15915494
    %v703 = vmul.f32 %v610, 0.15915494
    %v704 = vfloor.f32 %v700
    %v705 = vfloor.f32 %v701
    %v706 = vfloor.f32 %v702
    %v707 = vfloor.f32 %v703
    %v708 = vmul.f32 %v704, 6.2831855
    %v709 = vmul.f32 %v705, 6.2831855
    %v710 = vmul.f32 %v706, 6.2831855
    %v711 = vmul.f32 %v707, 6.2831855
    %v712 = vsub.f32 %v601, %v708
    %v713 = vsub.f32 %v603, %v709
    %v714 = vsub.f32 %v608, %v710
    %v715 = vsub.f32 %v610, %v711
    %v716 = vand.u32 2147483647, %v712
    %vm717 = vcmp.le.f32.partialorder %v716, 0.7853982
    %vm718 = vcmp.lt.s32.totalorder %v712, 0
    %v719 = vand.u32 %v712, 2139095040
    %v720 = vshrl.u32 %v719, 23
    %v721 = vsub.s32 %v720, 127
    %v722 = vand.u32 2147483647, %v712
    %v723 = vand.u32 %v722, 8388607
    %v724 = vor.u32 %v723, 8388608
    %v725 = vsub.s32 0, %v724
    %v726 = vadd.s32 %v721, 1
    %vm727 = vcmp.gt.s32.totalorder %v726, 0
    %v728 = vsel %vm727, %v726, 0
    %v729 = vshrl.u32 %v728, 5
    %v730 = vand.u32 %v728, 31
    %v731 = vsub.s32 32, %v730
    %v732 = vshrl.u32 683565275, %v731
    %v733 = vshll.u32 683565275, %v730
    %v734 = vshrl.u32 2475754826, %v731
    %v735 = vor.u32 %v733, %v734
    %v736 = vshll.u32 2475754826, %v730
    %v737 = vshrl.u32 2131351028, %v731
    %v738 = vor.u32 %v736, %v737
    %v739 = vshll.u32 2131351028, %v730
    %v740 = vshrl.u32 2102212464, %v731
    %v741 = vor.u32 %v739, %v740
    %v742 = vshll.u32 2102212464, %v730
    %v743 = vshrl.u32 920167782, %v731
    %v744 = vor.u32 %v742, %v743
    %v745 = vshll.u32 920167782, %v730
    %v746 = vshrl.u32 1326507024, %v731
    %v747 = vor.u32 %v745, %v746
    %vm748 = vcmp.lt.s32.totalorder %v729, 1
    %vm749 = vcmp.lt.s32.totalorder %v729, 2
    %vm750 = vcmp.lt.s32.totalorder %v729, 3
    %vm751 = vcmp.lt.s32.totalorder %v729, 4
    %v752 = vsel %vm748, %v732, %v735
    %v753 = vsel %vm751, %v741, 2102212464
    %v754 = vsel %vm750, %v738, %v753
    %v755 = vsel %vm749, %v752, %v754
    %v756 = vsel %vm748, %v735, %v738
    %v757 = vsel %vm751, %v744, 920167782
    %v758 = vsel %vm750, %v741, %v757
    %v759 = vsel %vm749, %v756, %v758
    %v760 = vsel %vm748, %v738, %v741
    %v761 = vsel %vm751, %v747, 1326507024
    %v762 = vsel %vm750, %v744, %v761
    %v763 = vsel %vm749, %v760, %v762
    %v764 = vshll.u32 %v724, 8
    %v765 = vmul.u32.u64.compose %v764, %v763
    %v766 = vextract.low.u32 %v765
    %v767 = vextract.high.u32 %v765
    %v768 = vmul.u32.u64.compose %v764, %v759
    %v769 = vextract.low.u32 %v768
    %v770 = vextract.high.u32 %v768
    %v771 = vmul.u32 %v764, %v755
    %v772 = vadd.s32 %v767, %v769
    %vm773 = vc.u32 %v767, %v769
    %v774 = vadd.s32 %v770, 1
    %v775 = vsel %vm773, %v774, %v770
    %v776 = vadd.s32 %v771, %v775
    %v777 = vadd.s32 %v776, 536870912
    %v778 = vshrl.u32 %v777, 30
    %v779 = vshll.u32 %v778, 30
    %v780 = vsub.s32 %v776, %v779
    %vm781 = vcmp.lt.s32.totalorder %v780, 0
    %v782 = vsub.s32 0, %v780
    %v783 = vsel %vm781, %v782, %v780
    %v784 = vclz %v783
    %v785 = vsub.s32 %v784, 2
    %vm786 = vcmp.gt.s32.totalorder 0, %v785
    %v787 = vsel %vm786, 0, %v785
    %v788 = vsub.s32 32, %v787
    %v789 = vshll.u32 %v780, %v787
    %v790 = vshrl.u32 %v772, %v788
    %v791 = vor.u32 %v789, %v790
    %v792 = vsub.s32 4294967266, %v787
    %v793 = vadd.s32 %v792, 127
    %v794 = vshll.u32 %v793, 23
    %v795 = vor.u32 4788187, %v794
    %v796 = vand.u32 2147483647, %v795
    %v798 = vcvt.s32.f32 %v791
    %v799 = vmul.f32 %v798, %v796
    %v800 = vxor.u32 %v799, 2147483648
    %v801 = vsel %vm718, %v800, %v799
    %v802 = vsub.s32 4, %v778
    %v803 = vsel %vm718, %v802, %v778
    %v804 = vsel %vm717, %v712, %v801
    %v805 = vsel %vm717, 0, %v803
    %v806 = vcosq.f32.pop %v804
    %v807 = vsinq.f32.pop %v804
    %vm808 = vweird.f32 %v712
    %v809 = vadd.s32 %v805, 3
    %v810 = vand.u32 %v809, 3
    %vm811 = vcmp.lt.s32.totalorder %v810, 2
    %vm812 = vcmp.eq.s32.totalorder %v810, 0
    %v813 = vxor.u32 %v807, 2147483648
    %v814 = vsel %vm812, %v806, %v813
    %vm815 = vcmp.eq.s32.totalorder %v810, 2
    %v816 = vxor.u32 %v806, 2147483648
    %v817 = vsel %vm815, %v816, %v807
    %v818 = vsel %vm811, %v814, %v817
    %v819 = vsel %vm808, nan, %v818
    %v820 = vand.u32 2147483647, %v713
    %vm821 = vcmp.le.f32.partialorder %v820, 0.7853982
    %vm822 = vcmp.lt.s32.totalorder %v713, 0
    %v823 = vand.u32 %v713, 2139095040
    %v824 = vshrl.u32 %v823, 23
    %v825 = vsub.s32 %v824, 127
    %v826 = vand.u32 2147483647, %v713
    %v827 = vand.u32 %v826, 8388607
    %v828 = vor.u32 %v827, 8388608
    %v829 = vsub.s32 0, %v828
    %v830 = vadd.s32 %v825, 1
    %vm831 = vcmp.gt.s32.totalorder %v830, 0
    %v832 = vsel %vm831, %v830, 0
    %v833 = vshrl.u32 %v832, 5
    %v834 = vand.u32 %v832, 31
    %v835 = vsub.s32 32, %v834
    %v836 = vshrl.u32 683565275, %v835
    %v837 = vshll.u32 683565275, %v834
    %v838 = vshrl.u32 2475754826, %v835
    %v839 = vor.u32 %v837, %v838
    %v840 = vshll.u32 2475754826, %v834
    %v841 = vshrl.u32 2131351028, %v835
    %v842 = vor.u32 %v840, %v841
    %v843 = vshll.u32 2131351028, %v834
    %v844 = vshrl.u32 2102212464, %v835
    %v845 = vor.u32 %v843, %v844
    %v846 = vshll.u32 2102212464, %v834
    %v847 = vshrl.u32 920167782, %v835
    %v848 = vor.u32 %v846, %v847
    %v849 = vshll.u32 920167782, %v834
    %v850 = vshrl.u32 1326507024, %v835
    %v851 = vor.u32 %v849, %v850
    %vm852 = vcmp.lt.s32.totalorder %v833, 1
    %vm853 = vcmp.lt.s32.totalorder %v833, 2
    %vm854 = vcmp.lt.s32.totalorder %v833, 3
    %vm855 = vcmp.lt.s32.totalorder %v833, 4
    %v856 = vsel %vm852, %v836, %v839
    %v857 = vsel %vm855, %v845, 2102212464
    %v858 = vsel %vm854, %v842, %v857
    %v859 = vsel %vm853, %v856, %v858
    %v860 = vsel %vm852, %v839, %v842
    %v861 = vsel %vm855, %v848, 920167782
    %v862 = vsel %vm854, %v845, %v861
    %v863 = vsel %vm853, %v860, %v862
    %v864 = vsel %vm852, %v842, %v845
    %v865 = vsel %vm855, %v851, 1326507024
    %v866 = vsel %vm854, %v848, %v865
    %v867 = vsel %vm853, %v864, %v866
    %v868 = vshll.u32 %v828, 8
    %v869 = vmul.u32.u64.compose %v868, %v867
    %v870 = vextract.low.u32 %v869
    %v871 = vextract.high.u32 %v869
    %v872 = vmul.u32.u64.compose %v868, %v863
    %v873 = vextract.low.u32 %v872
    %v874 = vextract.high.u32 %v872
    %v875 = vmul.u32 %v868, %v859
    %v876 = vadd.s32 %v871, %v873
    %vm877 = vc.u32 %v871, %v873
    %v878 = vadd.s32 %v874, 1
    %v879 = vsel %vm877, %v878, %v874
    %v880 = vadd.s32 %v875, %v879
    %v881 = vadd.s32 %v880, 536870912
    %v882 = vshrl.u32 %v881, 30
    %v883 = vshll.u32 %v882, 30
    %v884 = vsub.s32 %v880, %v883
    %vm885 = vcmp.lt.s32.totalorder %v884, 0
    %v886 = vsub.s32 0, %v884
    %v887 = vsel %vm885, %v886, %v884
    %v888 = vclz %v887
    %v889 = vsub.s32 %v888, 2
    %vm890 = vcmp.gt.s32.totalorder 0, %v889
    %v891 = vsel %vm890, 0, %v889
    %v892 = vsub.s32 32, %v891
    %v893 = vshll.u32 %v884, %v891
    %v894 = vshrl.u32 %v876, %v892
    %v895 = vor.u32 %v893, %v894
    %v896 = vsub.s32 4294967266, %v891
    %v897 = vadd.s32 %v896, 127
    %v898 = vshll.u32 %v897, 23
    %v899 = vor.u32 4788187, %v898
    %v900 = vand.u32 2147483647, %v899
    %v902 = vcvt.s32.f32 %v895
    %v903 = vmul.f32 %v902, %v900
    %v904 = vxor.u32 %v903, 2147483648
    %v905 = vsel %vm822, %v904, %v903
    %v906 = vsub.s32 4, %v882
    %v907 = vsel %vm822, %v906, %v882
    %v908 = vsel %vm821, %v713, %v905
    %v909 = vsel %vm821, 0, %v907
    %v910 = vcosq.f32.pop %v908
    %v911 = vsinq.f32.pop %v908
    %vm912 = vweird.f32 %v713
    %v913 = vadd.s32 %v909, 3
    %v914 = vand.u32 %v913, 3
    %vm915 = vcmp.lt.s32.totalorder %v914, 2
    %vm916 = vcmp.eq.s32.totalorder %v914, 0
    %v917 = vxor.u32 %v911, 2147483648
    %v918 = vsel %vm916, %v910, %v917
    %vm919 = vcmp.eq.s32.totalorder %v914, 2
    %v920 = vxor.u32 %v910, 2147483648
    %v921 = vsel %vm919, %v920, %v911
    %v922 = vsel %vm915, %v918, %v921
    %v923 = vsel %vm912, nan, %v922
    %v924 = vand.u32 2147483647, %v714
    %vm925 = vcmp.le.f32.partialorder %v924, 0.7853982
    %vm926 = vcmp.lt.s32.totalorder %v714, 0
    %v927 = vand.u32 %v714, 2139095040
    %v928 = vshrl.u32 %v927, 23
    %v929 = vsub.s32 %v928, 127
    %v930 = vand.u32 2147483647, %v714
    %v931 = vand.u32 %v930, 8388607
    %v932 = vor.u32 %v931, 8388608
    %v933 = vsub.s32 0, %v932
    %v934 = vadd.s32 %v929, 1
    %vm935 = vcmp.gt.s32.totalorder %v934, 0
    %v936 = vsel %vm935, %v934, 0
    %v937 = vshrl.u32 %v936, 5
    %v938 = vand.u32 %v936, 31
    %v939 = vsub.s32 32, %v938
    %v940 = vshrl.u32 683565275, %v939
    %v941 = vshll.u32 683565275, %v938
    %v942 = vshrl.u32 2475754826, %v939
    %v943 = vor.u32 %v941, %v942
    %v944 = vshll.u32 2475754826, %v938
    %v945 = vshrl.u32 2131351028, %v939
    %v946 = vor.u32 %v944, %v945
    %v947 = vshll.u32 2131351028, %v938
    %v948 = vshrl.u32 2102212464, %v939
    %v949 = vor.u32 %v947, %v948
    %v950 = vshll.u32 2102212464, %v938
    %v951 = vshrl.u32 920167782, %v939
    %v952 = vor.u32 %v950, %v951
    %v953 = vshll.u32 920167782, %v938
    %v954 = vshrl.u32 1326507024, %v939
    %v955 = vor.u32 %v953, %v954
    %vm956 = vcmp.lt.s32.totalorder %v937, 1
    %vm957 = vcmp.lt.s32.totalorder %v937, 2
    %vm958 = vcmp.lt.s32.totalorder %v937, 3
    %vm959 = vcmp.lt.s32.totalorder %v937, 4
    %v960 = vsel %vm956, %v940, %v943
    %v961 = vsel %vm959, %v949, 2102212464
    %v962 = vsel %vm958, %v946, %v961
    %v963 = vsel %vm957, %v960, %v962
    %v964 = vsel %vm956, %v943, %v946
    %v965 = vsel %vm959, %v952, 920167782
    %v966 = vsel %vm958, %v949, %v965
    %v967 = vsel %vm957, %v964, %v966
    %v968 = vsel %vm956, %v946, %v949
    %v969 = vsel %vm959, %v955, 1326507024
    %v970 = vsel %vm958, %v952, %v969
    %v971 = vsel %vm957, %v968, %v970
    %v972 = vshll.u32 %v932, 8
    %v973 = vmul.u32.u64.compose %v972, %v971
    %v974 = vextract.low.u32 %v973
    %v975 = vextract.high.u32 %v973
    %v976 = vmul.u32.u64.compose %v972, %v967
    %v977 = vextract.low.u32 %v976
    %v978 = vextract.high.u32 %v976
    %v979 = vmul.u32 %v972, %v963
    %v980 = vadd.s32 %v975, %v977
    %vm981 = vc.u32 %v975, %v977
    %v982 = vadd.s32 %v978, 1
    %v983 = vsel %vm981, %v982, %v978
    %v984 = vadd.s32 %v979, %v983
    %v985 = vadd.s32 %v984, 536870912
    %v986 = vshrl.u32 %v985, 30
    %v987 = vshll.u32 %v986, 30
    %v988 = vsub.s32 %v984, %v987
    %vm989 = vcmp.lt.s32.totalorder %v988, 0
    %v990 = vsub.s32 0, %v988
    %v991 = vsel %vm989, %v990, %v988
    %v992 = vclz %v991
    %v993 = vsub.s32 %v992, 2
    %vm994 = vcmp.gt.s32.totalorder 0, %v993
    %v995 = vsel %vm994, 0, %v993
    %v996 = vsub.s32 32, %v995
    %v997 = vshll.u32 %v988, %v995
    %v998 = vshrl.u32 %v980, %v996
    %v999 = vor.u32 %v997, %v998
    %v1000 = vsub.s32 4294967266, %v995
    %v1001 = vadd.s32 %v1000, 127
    %v1002 = vshll.u32 %v1001, 23
    %v1003 = vor.u32 4788187, %v1002
    %v1004 = vand.u32 2147483647, %v1003
    %v1006 = vcvt.s32.f32 %v999
    %v1007 = vmul.f32 %v1006, %v1004
    %v1008 = vxor.u32 %v1007, 2147483648
    %v1009 = vsel %vm926, %v1008, %v1007
    %v1010 = vsub.s32 4, %v986
    %v1011 = vsel %vm926, %v1010, %v986
    %v1012 = vsel %vm925, %v714, %v1009
    %v1013 = vsel %vm925, 0, %v1011
    %v1014 = vcosq.f32.pop %v1012
    %v1015 = vsinq.f32.pop %v1012
    %vm1016 = vweird.f32 %v714
    %v1017 = vadd.s32 %v1013, 3
    %v1018 = vand.u32 %v1017, 3
    %vm1019 = vcmp.lt.s32.totalorder %v1018, 2
    %vm1020 = vcmp.eq.s32.totalorder %v1018, 0
    %v1021 = vxor.u32 %v1015, 2147483648
    %v1022 = vsel %vm1020, %v1014, %v1021
    %vm1023 = vcmp.eq.s32.totalorder %v1018, 2
    %v1024 = vxor.u32 %v1014, 2147483648
    %v1025 = vsel %vm1023, %v1024, %v1015
    %v1026 = vsel %vm1019, %v1022, %v1025
    %v1027 = vsel %vm1016, nan, %v1026
    %v1028 = vand.u32 2147483647, %v715
    %vm1029 = vcmp.le.f32.partialorder %v1028, 0.7853982
    %vm1030 = vcmp.lt.s32.totalorder %v715, 0
    %v1031 = vand.u32 %v715, 2139095040
    %v1032 = vshrl.u32 %v1031, 23
    %v1033 = vsub.s32 %v1032, 127
    %v1034 = vand.u32 2147483647, %v715
    %v1035 = vand.u32 %v1034, 8388607
    %v1036 = vor.u32 %v1035, 8388608
    %v1037 = vsub.s32 0, %v1036
    %v1038 = vadd.s32 %v1033, 1
    %vm1039 = vcmp.gt.s32.totalorder %v1038, 0
    %v1040 = vsel %vm1039, %v1038, 0
    %v1041 = vshrl.u32 %v1040, 5
    %v1042 = vand.u32 %v1040, 31
    %v1043 = vsub.s32 32, %v1042
    %v1044 = vshrl.u32 683565275, %v1043
    %v1045 = vshll.u32 683565275, %v1042
    %v1046 = vshrl.u32 2475754826, %v1043
    %v1047 = vor.u32 %v1045, %v1046
    %v1048 = vshll.u32 2475754826, %v1042
    %v1049 = vshrl.u32 2131351028, %v1043
    %v1050 = vor.u32 %v1048, %v1049
    %v1051 = vshll.u32 2131351028, %v1042
    %v1052 = vshrl.u32 2102212464, %v1043
    %v1053 = vor.u32 %v1051, %v1052
    %v1054 = vshll.u32 2102212464, %v1042
    %v1055 = vshrl.u32 920167782, %v1043
    %v1056 = vor.u32 %v1054, %v1055
    %v1057 = vshll.u32 920167782, %v1042
    %v1058 = vshrl.u32 1326507024, %v1043
    %v1059 = vor.u32 %v1057, %v1058
    %vm1060 = vcmp.lt.s32.totalorder %v1041, 1
    %vm1061 = vcmp.lt.s32.totalorder %v1041, 2
    %vm1062 = vcmp.lt.s32.totalorder %v1041, 3
    %vm1063 = vcmp.lt.s32.totalorder %v1041, 4
    %v1064 = vsel %vm1060, %v1044, %v1047
    %v1065 = vsel %vm1063, %v1053, 2102212464
    %v1066 = vsel %vm1062, %v1050, %v1065
    %v1067 = vsel %vm1061, %v1064, %v1066
    %v1068 = vsel %vm1060, %v1047, %v1050
    %v1069 = vsel %vm1063, %v1056, 920167782
    %v1070 = vsel %vm1062, %v1053, %v1069
    %v1071 = vsel %vm1061, %v1068, %v1070
    %v1072 = vsel %vm1060, %v1050, %v1053
    %v1073 = vsel %vm1063, %v1059, 1326507024
    %v1074 = vsel %vm1062, %v1056, %v1073
    %v1075 = vsel %vm1061, %v1072, %v1074
    %v1076 = vshll.u32 %v1036, 8
    %v1077 = vmul.u32.u64.compose %v1076, %v1075
    %v1078 = vextract.low.u32 %v1077
    %v1079 = vextract.high.u32 %v1077
    %v1080 = vmul.u32.u64.compose %v1076, %v1071
    %v1081 = vextract.low.u32 %v1080
    %v1082 = vextract.high.u32 %v1080
    %v1083 = vmul.u32 %v1076, %v1067
    %v1084 = vadd.s32 %v1079, %v1081
    %vm1085 = vc.u32 %v1079, %v1081
    %v1086 = vadd.s32 %v1082, 1
    %v1087 = vsel %vm1085, %v1086, %v1082
    %v1088 = vadd.s32 %v1083, %v1087
    %v1089 = vadd.s32 %v1088, 536870912
    %v1090 = vshrl.u32 %v1089, 30
    %v1091 = vshll.u32 %v1090, 30
    %v1092 = vsub.s32 %v1088, %v1091
    %vm1093 = vcmp.lt.s32.totalorder %v1092, 0
    %v1094 = vsub.s32 0, %v1092
    %v1095 = vsel %vm1093, %v1094, %v1092
    %v1096 = vclz %v1095
    %v1097 = vsub.s32 %v1096, 2
    %vm1098 = vcmp.gt.s32.totalorder 0, %v1097
    %v1099 = vsel %vm1098, 0, %v1097
    %v1100 = vsub.s32 32, %v1099
    %v1101 = vshll.u32 %v1092, %v1099
    %v1102 = vshrl.u32 %v1084, %v1100
    %v1103 = vor.u32 %v1101, %v1102
    %v1104 = vsub.s32 4294967266, %v1099
    %v1105 = vadd.s32 %v1104, 127
    %v1106 = vshll.u32 %v1105, 23
    %v1107 = vor.u32 4788187, %v1106
    %v1108 = vand.u32 2147483647, %v1107
    %v1110 = vcvt.s32.f32 %v1103
    %v1111 = vmul.f32 %v1110, %v1108
    %v1112 = vxor.u32 %v1111, 2147483648
    %v1113 = vsel %vm1030, %v1112, %v1111
    %v1114 = vsub.s32 4, %v1090
    %v1115 = vsel %vm1030, %v1114, %v1090
    %v1116 = vsel %vm1029, %v715, %v1113
    %v1117 = vsel %vm1029, 0, %v1115
    %v1118 = vcosq.f32.pop %v1116
    %v1119 = vsinq.f32.pop %v1116
    %vm1120 = vweird.f32 %v715
    %v1121 = vadd.s32 %v1117, 3
    %v1122 = vand.u32 %v1121, 3
    %vm1123 = vcmp.lt.s32.totalorder %v1122, 2
    %vm1124 = vcmp.eq.s32.totalorder %v1122, 0
    %v1125 = vxor.u32 %v1119, 2147483648
    %v1126 = vsel %vm1124, %v1118, %v1125
    %vm1127 = vcmp.eq.s32.totalorder %v1122, 2
    %v1128 = vxor.u32 %v1118, 2147483648
    %v1129 = vsel %vm1127, %v1128, %v1119
    %v1130 = vsel %vm1123, %v1126, %v1129
    %v1131 = vsel %vm1120, nan, %v1130
    %v1132 = vmul.f32 %v690, 0.1
    %v1133 = vmul.f32 %v692, 0.1
    %v1134 = vmul.f32 %v696, 0.1
    %v1135 = vmul.f32 %v698, 0.1
    %v1136 = vmul.f32 %v690, -0.030333333
    %v1137 = vmul.f32 %v692, -0.030333333
    %v1138 = vmul.f32 %v696, -0.030333333
    %v1139 = vmul.f32 %v698, -0.030333333
    %v1140 = vadd.f32 %v1136, 0.033333335
    %v1141 = vadd.f32 %v1137, 0.033333335
    %v1142 = vadd.f32 %v1138, 0.033333335
    %v1143 = vadd.f32 %v1139, 0.033333335
    %v1144 = vlaneseq
    %v1145 = vshrl.u32 %v1144, 7
    %s1146 = smul.u32 0, 16
    %v1147 = vstv %s1146
    %v1148 = vadd.s32 %v1145, %v1147
    %v1149 = vlaneseq
    %v1150 = vand.u32 %v1149, 127
    %v1151 = vadd.s32 %v1150, 128
    %s1152 = smul.u32 0, 256
    %v1153 = vstv %s1152
    %v1154 = vadd.s32 %v1150, %v1153
    %v1155 = vadd.s32 %v1151, %v1153
    %s1156 = sld [smem:[#allocation3]]
    %s1157 = sxor.u32 %s1156, 2654435761
    %s1158 = sshra.s32 %s1157, 16
    %s1159 = sand.u32 %s1158, 65535
    %s1160 = sxor.u32 %s1157, %s1159
    %s1161 = smul.u32 %s1160, 2246822507
    %s1162 = sshra.s32 %s1161, 13
    %s1163 = sand.u32 %s1162, 524287
    %s1164 = sxor.u32 %s1161, %s1163
    %s1165 = smul.u32 %s1164, 3266489909
    %s1166 = sshra.s32 %s1165, 16
    %s1167 = sand.u32 %s1166, 65535
    %s1168 = sxor.u32 %s1165, %s1167
    %v1169 = vmul.u32 %v1148, 256
    %v1170 = vadd.s32 %v1169, %v1154
    %v1171 = vadd.s32 %v1169, %v1155
    %v1172 = vstv %s1168
    %v1173 = vxor.u32 %v1170, %v1172
    %v1174 = vxor.u32 %v1171, %v1172
    %v1175 = vshra.s32 %v1173, 16
    %v1176 = vshra.s32 %v1174, 16
    %v1177 = vand.u32 %v1175, 65535
    %v1178 = vand.u32 %v1176, 65535
    %v1179 = vxor.u32 %v1173, %v1177
    %v1180 = vxor.u32 %v1174, %v1178
    %v1181 = vmul.u32 %v1179, 2246822507
    %v1182 = vmul.u32 %v1180, 2246822507
    %v1183 = vshra.s32 %v1181, 13
    %v1184 = vshra.s32 %v1182, 13
    %v1185 = vand.u32 %v1183, 524287
    %v1186 = vand.u32 %v1184, 524287
    %v1187 = vxor.u32 %v1181, %v1185
    %v1188 = vxor.u32 %v1182, %v1186
    %v1189 = vmul.u32 %v1187, 3266489909
    %v1190 = vmul.u32 %v1188, 3266489909
    %v1191 = vshra.s32 %v1189, 16
    %v1192 = vshra.s32 %v1190, 16
    %v1193 = vand.u32 %v1191, 65535
    %v1194 = vand.u32 %v1192, 65535
    %v1195 = vxor.u32 %v1189, %v1193
    %v1196 = vxor.u32 %v1190, %v1194
    %v1197 = vadd.s32 %v1195, 2654435769
    %v1198 = vadd.s32 %v1196, 2654435769
    %v1199 = vshra.s32 %v1197, 16
    %v1200 = vshra.s32 %v1198, 16
    %v1201 = vand.u32 %v1199, 65535
    %v1202 = vand.u32 %v1200, 65535
    %v1203 = vxor.u32 %v1197, %v1201
    %v1204 = vxor.u32 %v1198, %v1202
    %v1205 = vmul.u32 %v1203, 2246822507
    %v1206 = vmul.u32 %v1204, 2246822507
    %v1207 = vshra.s32 %v1205, 13
    %v1208 = vshra.s32 %v1206, 13
    %v1209 = vand.u32 %v1207, 524287
    %v1210 = vand.u32 %v1208, 524287
    %v1211 = vxor.u32 %v1205, %v1209
    %v1212 = vxor.u32 %v1206, %v1210
    %v1213 = vmul.u32 %v1211, 3266489909
    %v1214 = vmul.u32 %v1212, 3266489909
    %v1215 = vshra.s32 %v1213, 16
    %v1216 = vshra.s32 %v1214, 16
    %v1217 = vand.u32 %v1215, 65535
    %v1218 = vand.u32 %v1216, 65535
    %v1219 = vxor.u32 %v1213, %v1217
    %v1220 = vxor.u32 %v1214, %v1218
    %v1221 = vand.u32 %v1195, 8388607
    %v1222 = vand.u32 %v1196, 8388607
    %v1223 = vcvt.s32.f32 %v1221
    %v1224 = vcvt.s32.f32 %v1222
    %v1225 = vadd.f32 %v1223, 0.5
    %v1226 = vadd.f32 %v1224, 0.5
    %v1227 = vmul.f32 %v1225, 1.1920929e-07
    %v1228 = vmul.f32 %v1226, 1.1920929e-07
    %v1229 = vand.u32 %v1219, 8388607
    %v1230 = vand.u32 %v1220, 8388607
    %v1231 = vcvt.s32.f32 %v1229
    %v1232 = vcvt.s32.f32 %v1230
    %v1233 = vadd.f32 %v1231, 0.5
    %v1234 = vadd.f32 %v1232, 0.5
    %v1235 = vmul.f32 %v1233, 1.1920929e-07
    %v1236 = vmul.f32 %v1234, 1.1920929e-07
    %v1237 = vlog2.pop %v1227
    %v1238 = vmul.f32 %v1237, 0.6931472
    %v1239 = vlog2.pop %v1228
    %v1240 = vmul.f32 %v1239, 0.6931472
    %v1241 = vmul.f32 %v1238, -2.0
    %v1242 = vmul.f32 %v1240, -2.0
    %v1243 = vrsqrt.pop %v1241
    %v1244 = vmul.f32 %v1241, %v1243
    %vm1245 = vcmp.eq.f32.partialorder %v1241, inf
    %v1246 = vsel %vm1245, %v1241, %v1244
    %vm1247 = vcmp.eq.f32.partialorder %v1241, 0.0
    %v1248 = vand.u32 %v1241, 2147483648
    %v1249 = vsel %vm1247, %v1248, %v1246
    %v1250 = vrsqrt.pop %v1242
    %v1251 = vmul.f32 %v1242, %v1250
    %vm1252 = vcmp.eq.f32.partialorder %v1242, inf
    %v1253 = vsel %vm1252, %v1242, %v1251
    %vm1254 = vcmp.eq.f32.partialorder %v1242, 0.0
    %v1255 = vand.u32 %v1242, 2147483648
    %v1256 = vsel %vm1254, %v1255, %v1253
    %v1257 = vmul.f32 %v1235, 6.2831855
    %v1258 = vmul.f32 %v1236, 6.2831855
    %v1259 = vand.u32 2147483647, %v1257
    %vm1260 = vcmp.le.f32.partialorder %v1259, 0.7853982
    %vm1261 = vcmp.lt.s32.totalorder %v1257, 0
    %v1262 = vand.u32 %v1257, 2139095040
    %v1263 = vshrl.u32 %v1262, 23
    %v1264 = vsub.s32 %v1263, 127
    %v1265 = vand.u32 2147483647, %v1257
    %v1266 = vand.u32 %v1265, 8388607
    %v1267 = vor.u32 %v1266, 8388608
    %v1268 = vsub.s32 0, %v1267
    %v1269 = vadd.s32 %v1264, 1
    %vm1270 = vcmp.gt.s32.totalorder %v1269, 0
    %v1271 = vsel %vm1270, %v1269, 0
    %v1272 = vshrl.u32 %v1271, 5
    %v1273 = vand.u32 %v1271, 31
    %v1274 = vsub.s32 32, %v1273
    %v1275 = vshrl.u32 683565275, %v1274
    %v1276 = vshll.u32 683565275, %v1273
    %v1277 = vshrl.u32 2475754826, %v1274
    %v1278 = vor.u32 %v1276, %v1277
    %v1279 = vshll.u32 2475754826, %v1273
    %v1280 = vshrl.u32 2131351028, %v1274
    %v1281 = vor.u32 %v1279, %v1280
    %v1282 = vshll.u32 2131351028, %v1273
    %v1283 = vshrl.u32 2102212464, %v1274
    %v1284 = vor.u32 %v1282, %v1283
    %v1285 = vshll.u32 2102212464, %v1273
    %v1286 = vshrl.u32 920167782, %v1274
    %v1287 = vor.u32 %v1285, %v1286
    %v1288 = vshll.u32 920167782, %v1273
    %v1289 = vshrl.u32 1326507024, %v1274
    %v1290 = vor.u32 %v1288, %v1289
    %vm1291 = vcmp.lt.s32.totalorder %v1272, 1
    %vm1292 = vcmp.lt.s32.totalorder %v1272, 2
    %vm1293 = vcmp.lt.s32.totalorder %v1272, 3
    %vm1294 = vcmp.lt.s32.totalorder %v1272, 4
    %v1295 = vsel %vm1291, %v1275, %v1278
    %v1296 = vsel %vm1294, %v1284, 2102212464
    %v1297 = vsel %vm1293, %v1281, %v1296
    %v1298 = vsel %vm1292, %v1295, %v1297
    %v1299 = vsel %vm1291, %v1278, %v1281
    %v1300 = vsel %vm1294, %v1287, 920167782
    %v1301 = vsel %vm1293, %v1284, %v1300
    %v1302 = vsel %vm1292, %v1299, %v1301
    %v1303 = vsel %vm1291, %v1281, %v1284
    %v1304 = vsel %vm1294, %v1290, 1326507024
    %v1305 = vsel %vm1293, %v1287, %v1304
    %v1306 = vsel %vm1292, %v1303, %v1305
    %v1307 = vshll.u32 %v1267, 8
    %v1308 = vmul.u32.u64.compose %v1307, %v1306
    %v1309 = vextract.low.u32 %v1308
    %v1310 = vextract.high.u32 %v1308
    %v1311 = vmul.u32.u64.compose %v1307, %v1302
    %v1312 = vextract.low.u32 %v1311
    %v1313 = vextract.high.u32 %v1311
    %v1314 = vmul.u32 %v1307, %v1298
    %v1315 = vadd.s32 %v1310, %v1312
    %vm1316 = vc.u32 %v1310, %v1312
    %v1317 = vadd.s32 %v1313, 1
    %v1318 = vsel %vm1316, %v1317, %v1313
    %v1319 = vadd.s32 %v1314, %v1318
    %v1320 = vadd.s32 %v1319, 536870912
    %v1321 = vshrl.u32 %v1320, 30
    %v1322 = vshll.u32 %v1321, 30
    %v1323 = vsub.s32 %v1319, %v1322
    %vm1324 = vcmp.lt.s32.totalorder %v1323, 0
    %v1325 = vsub.s32 0, %v1323
    %v1326 = vsel %vm1324, %v1325, %v1323
    %v1327 = vclz %v1326
    %v1328 = vsub.s32 %v1327, 2
    %vm1329 = vcmp.gt.s32.totalorder 0, %v1328
    %v1330 = vsel %vm1329, 0, %v1328
    %v1331 = vsub.s32 32, %v1330
    %v1332 = vshll.u32 %v1323, %v1330
    %v1333 = vshrl.u32 %v1315, %v1331
    %v1334 = vor.u32 %v1332, %v1333
    %v1335 = vsub.s32 4294967266, %v1330
    %v1336 = vadd.s32 %v1335, 127
    %v1337 = vshll.u32 %v1336, 23
    %v1338 = vor.u32 4788187, %v1337
    %v1339 = vand.u32 2147483647, %v1338
    %v1341 = vcvt.s32.f32 %v1334
    %v1342 = vmul.f32 %v1341, %v1339
    %v1343 = vxor.u32 %v1342, 2147483648
    %v1344 = vsel %vm1261, %v1343, %v1342
    %v1345 = vsub.s32 4, %v1321
    %v1346 = vsel %vm1261, %v1345, %v1321
    %v1347 = vsel %vm1260, %v1257, %v1344
    %v1348 = vsel %vm1260, 0, %v1346
    %v1349 = vcosq.f32.pop %v1347
    %v1350 = vsinq.f32.pop %v1347
    %vm1351 = vweird.f32 %v1257
    %v1352 = vand.u32 %v1348, 3
    %vm1353 = vcmp.lt.s32.totalorder %v1352, 2
    %vm1354 = vcmp.eq.s32.totalorder %v1352, 0
    %v1355 = vxor.u32 %v1350, 2147483648
    %v1356 = vsel %vm1354, %v1349, %v1355
    %vm1357 = vcmp.eq.s32.totalorder %v1352, 2
    %v1358 = vxor.u32 %v1349, 2147483648
    %v1359 = vsel %vm1357, %v1358, %v1350
    %v1360 = vsel %vm1353, %v1356, %v1359
    %v1361 = vsel %vm1351, nan, %v1360
    %v1362 = vand.u32 2147483647, %v1258
    %vm1363 = vcmp.le.f32.partialorder %v1362, 0.7853982
    %vm1364 = vcmp.lt.s32.totalorder %v1258, 0
    %v1365 = vand.u32 %v1258, 2139095040
    %v1366 = vshrl.u32 %v1365, 23
    %v1367 = vsub.s32 %v1366, 127
    %v1368 = vand.u32 2147483647, %v1258
    %v1369 = vand.u32 %v1368, 8388607
    %v1370 = vor.u32 %v1369, 8388608
    %v1371 = vsub.s32 0, %v1370
    %v1372 = vadd.s32 %v1367, 1
    %vm1373 = vcmp.gt.s32.totalorder %v1372, 0
    %v1374 = vsel %vm1373, %v1372, 0
    %v1375 = vshrl.u32 %v1374, 5
    %v1376 = vand.u32 %v1374, 31
    %v1377 = vsub.s32 32, %v1376
    %v1378 = vshrl.u32 683565275, %v1377
    %v1379 = vshll.u32 683565275, %v1376
    %v1380 = vshrl.u32 2475754826, %v1377
    %v1381 = vor.u32 %v1379, %v1380
    %v1382 = vshll.u32 2475754826, %v1376
    %v1383 = vshrl.u32 2131351028, %v1377
    %v1384 = vor.u32 %v1382, %v1383
    %v1385 = vshll.u32 2131351028, %v1376
    %v1386 = vshrl.u32 2102212464, %v1377
    %v1387 = vor.u32 %v1385, %v1386
    %v1388 = vshll.u32 2102212464, %v1376
    %v1389 = vshrl.u32 920167782, %v1377
    %v1390 = vor.u32 %v1388, %v1389
    %v1391 = vshll.u32 920167782, %v1376
    %v1392 = vshrl.u32 1326507024, %v1377
    %v1393 = vor.u32 %v1391, %v1392
    %vm1394 = vcmp.lt.s32.totalorder %v1375, 1
    %vm1395 = vcmp.lt.s32.totalorder %v1375, 2
    %vm1396 = vcmp.lt.s32.totalorder %v1375, 3
    %vm1397 = vcmp.lt.s32.totalorder %v1375, 4
    %v1398 = vsel %vm1394, %v1378, %v1381
    %v1399 = vsel %vm1397, %v1387, 2102212464
    %v1400 = vsel %vm1396, %v1384, %v1399
    %v1401 = vsel %vm1395, %v1398, %v1400
    %v1402 = vsel %vm1394, %v1381, %v1384
    %v1403 = vsel %vm1397, %v1390, 920167782
    %v1404 = vsel %vm1396, %v1387, %v1403
    %v1405 = vsel %vm1395, %v1402, %v1404
    %v1406 = vsel %vm1394, %v1384, %v1387
    %v1407 = vsel %vm1397, %v1393, 1326507024
    %v1408 = vsel %vm1396, %v1390, %v1407
    %v1409 = vsel %vm1395, %v1406, %v1408
    %v1410 = vshll.u32 %v1370, 8
    %v1411 = vmul.u32.u64.compose %v1410, %v1409
    %v1412 = vextract.low.u32 %v1411
    %v1413 = vextract.high.u32 %v1411
    %v1414 = vmul.u32.u64.compose %v1410, %v1405
    %v1415 = vextract.low.u32 %v1414
    %v1416 = vextract.high.u32 %v1414
    %v1417 = vmul.u32 %v1410, %v1401
    %v1418 = vadd.s32 %v1413, %v1415
    %vm1419 = vc.u32 %v1413, %v1415
    %v1420 = vadd.s32 %v1416, 1
    %v1421 = vsel %vm1419, %v1420, %v1416
    %v1422 = vadd.s32 %v1417, %v1421
    %v1423 = vadd.s32 %v1422, 536870912
    %v1424 = vshrl.u32 %v1423, 30
    %v1425 = vshll.u32 %v1424, 30
    %v1426 = vsub.s32 %v1422, %v1425
    %vm1427 = vcmp.lt.s32.totalorder %v1426, 0
    %v1428 = vsub.s32 0, %v1426
    %v1429 = vsel %vm1427, %v1428, %v1426
    %v1430 = vclz %v1429
    %v1431 = vsub.s32 %v1430, 2
    %vm1432 = vcmp.gt.s32.totalorder 0, %v1431
    %v1433 = vsel %vm1432, 0, %v1431
    %v1434 = vsub.s32 32, %v1433
    %v1435 = vshll.u32 %v1426, %v1433
    %v1436 = vshrl.u32 %v1418, %v1434
    %v1437 = vor.u32 %v1435, %v1436
    %v1438 = vsub.s32 4294967266, %v1433
    %v1439 = vadd.s32 %v1438, 127
    %v1440 = vshll.u32 %v1439, 23
    %v1441 = vor.u32 4788187, %v1440
    %v1442 = vand.u32 2147483647, %v1441
    %v1444 = vcvt.s32.f32 %v1437
    %v1445 = vmul.f32 %v1444, %v1442
    %v1446 = vxor.u32 %v1445, 2147483648
    %v1447 = vsel %vm1364, %v1446, %v1445
    %v1448 = vsub.s32 4, %v1424
    %v1449 = vsel %vm1364, %v1448, %v1424
    %v1450 = vsel %vm1363, %v1258, %v1447
    %v1451 = vsel %vm1363, 0, %v1449
    %v1452 = vcosq.f32.pop %v1450
    %v1453 = vsinq.f32.pop %v1450
    %vm1454 = vweird.f32 %v1258
    %v1455 = vand.u32 %v1451, 3
    %vm1456 = vcmp.lt.s32.totalorder %v1455, 2
    %vm1457 = vcmp.eq.s32.totalorder %v1455, 0
    %v1458 = vxor.u32 %v1453, 2147483648
    %v1459 = vsel %vm1457, %v1452, %v1458
    %vm1460 = vcmp.eq.s32.totalorder %v1455, 2
    %v1461 = vxor.u32 %v1452, 2147483648
    %v1462 = vsel %vm1460, %v1461, %v1453
    %v1463 = vsel %vm1456, %v1459, %v1462
    %v1464 = vsel %vm1454, nan, %v1463
    %v1465 = vmul.f32 %v1249, %v1361
    %v1466 = vmul.f32 %v1256, %v1464
    %v1467 = vand.u32 2147483647, %v1257
    %vm1468 = vcmp.le.f32.partialorder %v1467, 0.7853982
    %vm1469 = vcmp.lt.s32.totalorder %v1257, 0
    %v1470 = vand.u32 %v1257, 2139095040
    %v1471 = vshrl.u32 %v1470, 23
    %v1472 = vsub.s32 %v1471, 127
    %v1473 = vand.u32 2147483647, %v1257
    %v1474 = vand.u32 %v1473, 8388607
    %v1475 = vor.u32 %v1474, 8388608
    %v1476 = vsub.s32 0, %v1475
    %v1477 = vadd.s32 %v1472, 1
    %vm1478 = vcmp.gt.s32.totalorder %v1477, 0
    %v1479 = vsel %vm1478, %v1477, 0
    %v1480 = vshrl.u32 %v1479, 5
    %v1481 = vand.u32 %v1479, 31
    %v1482 = vsub.s32 32, %v1481
    %v1483 = vshrl.u32 683565275, %v1482
    %v1484 = vshll.u32 683565275, %v1481
    %v1485 = vshrl.u32 2475754826, %v1482
    %v1486 = vor.u32 %v1484, %v1485
    %v1487 = vshll.u32 2475754826, %v1481
    %v1488 = vshrl.u32 2131351028, %v1482
    %v1489 = vor.u32 %v1487, %v1488
    %v1490 = vshll.u32 2131351028, %v1481
    %v1491 = vshrl.u32 2102212464, %v1482
    %v1492 = vor.u32 %v1490, %v1491
    %v1493 = vshll.u32 2102212464, %v1481
    %v1494 = vshrl.u32 920167782, %v1482
    %v1495 = vor.u32 %v1493, %v1494
    %v1496 = vshll.u32 920167782, %v1481
    %v1497 = vshrl.u32 1326507024, %v1482
    %v1498 = vor.u32 %v1496, %v1497
    %vm1499 = vcmp.lt.s32.totalorder %v1480, 1
    %vm1500 = vcmp.lt.s32.totalorder %v1480, 2
    %vm1501 = vcmp.lt.s32.totalorder %v1480, 3
    %vm1502 = vcmp.lt.s32.totalorder %v1480, 4
    %v1503 = vsel %vm1499, %v1483, %v1486
    %v1504 = vsel %vm1502, %v1492, 2102212464
    %v1505 = vsel %vm1501, %v1489, %v1504
    %v1506 = vsel %vm1500, %v1503, %v1505
    %v1507 = vsel %vm1499, %v1486, %v1489
    %v1508 = vsel %vm1502, %v1495, 920167782
    %v1509 = vsel %vm1501, %v1492, %v1508
    %v1510 = vsel %vm1500, %v1507, %v1509
    %v1511 = vsel %vm1499, %v1489, %v1492
    %v1512 = vsel %vm1502, %v1498, 1326507024
    %v1513 = vsel %vm1501, %v1495, %v1512
    %v1514 = vsel %vm1500, %v1511, %v1513
    %v1515 = vshll.u32 %v1475, 8
    %v1516 = vmul.u32.u64.compose %v1515, %v1514
    %v1517 = vextract.low.u32 %v1516
    %v1518 = vextract.high.u32 %v1516
    %v1519 = vmul.u32.u64.compose %v1515, %v1510
    %v1520 = vextract.low.u32 %v1519
    %v1521 = vextract.high.u32 %v1519
    %v1522 = vmul.u32 %v1515, %v1506
    %v1523 = vadd.s32 %v1518, %v1520
    %vm1524 = vc.u32 %v1518, %v1520
    %v1525 = vadd.s32 %v1521, 1
    %v1526 = vsel %vm1524, %v1525, %v1521
    %v1527 = vadd.s32 %v1522, %v1526
    %v1528 = vadd.s32 %v1527, 536870912
    %v1529 = vshrl.u32 %v1528, 30
    %v1530 = vshll.u32 %v1529, 30
    %v1531 = vsub.s32 %v1527, %v1530
    %vm1532 = vcmp.lt.s32.totalorder %v1531, 0
    %v1533 = vsub.s32 0, %v1531
    %v1534 = vsel %vm1532, %v1533, %v1531
    %v1535 = vclz %v1534
    %v1536 = vsub.s32 %v1535, 2
    %vm1537 = vcmp.gt.s32.totalorder 0, %v1536
    %v1538 = vsel %vm1537, 0, %v1536
    %v1539 = vsub.s32 32, %v1538
    %v1540 = vshll.u32 %v1531, %v1538
    %v1541 = vshrl.u32 %v1523, %v1539
    %v1542 = vor.u32 %v1540, %v1541
    %v1543 = vsub.s32 4294967266, %v1538
    %v1544 = vadd.s32 %v1543, 127
    %v1545 = vshll.u32 %v1544, 23
    %v1546 = vor.u32 4788187, %v1545
    %v1547 = vand.u32 2147483647, %v1546
    %v1549 = vcvt.s32.f32 %v1542
    %v1550 = vmul.f32 %v1549, %v1547
    %v1551 = vxor.u32 %v1550, 2147483648
    %v1552 = vsel %vm1469, %v1551, %v1550
    %v1553 = vsub.s32 4, %v1529
    %v1554 = vsel %vm1469, %v1553, %v1529
    %v1555 = vsel %vm1468, %v1257, %v1552
    %v1556 = vsel %vm1468, 0, %v1554
    %v1557 = vcosq.f32.pop %v1555
    %v1558 = vsinq.f32.pop %v1555
    %vm1559 = vweird.f32 %v1257
    %v1560 = vadd.s32 %v1556, 3
    %v1561 = vand.u32 %v1560, 3
    %vm1562 = vcmp.lt.s32.totalorder %v1561, 2
    %vm1563 = vcmp.eq.s32.totalorder %v1561, 0
    %v1564 = vxor.u32 %v1558, 2147483648
    %v1565 = vsel %vm1563, %v1557, %v1564
    %vm1566 = vcmp.eq.s32.totalorder %v1561, 2
    %v1567 = vxor.u32 %v1557, 2147483648
    %v1568 = vsel %vm1566, %v1567, %v1558
    %v1569 = vsel %vm1562, %v1565, %v1568
    %v1570 = vsel %vm1559, nan, %v1569
    %v1571 = vand.u32 2147483647, %v1258
    %vm1572 = vcmp.le.f32.partialorder %v1571, 0.7853982
    %vm1573 = vcmp.lt.s32.totalorder %v1258, 0
    %v1574 = vand.u32 %v1258, 2139095040
    %v1575 = vshrl.u32 %v1574, 23
    %v1576 = vsub.s32 %v1575, 127
    %v1577 = vand.u32 2147483647, %v1258
    %v1578 = vand.u32 %v1577, 8388607
    %v1579 = vor.u32 %v1578, 8388608
    %v1580 = vsub.s32 0, %v1579
    %v1581 = vadd.s32 %v1576, 1
    %vm1582 = vcmp.gt.s32.totalorder %v1581, 0
    %v1583 = vsel %vm1582, %v1581, 0
    %v1584 = vshrl.u32 %v1583, 5
    %v1585 = vand.u32 %v1583, 31
    %v1586 = vsub.s32 32, %v1585
    %v1587 = vshrl.u32 683565275, %v1586
    %v1588 = vshll.u32 683565275, %v1585
    %v1589 = vshrl.u32 2475754826, %v1586
    %v1590 = vor.u32 %v1588, %v1589
    %v1591 = vshll.u32 2475754826, %v1585
    %v1592 = vshrl.u32 2131351028, %v1586
    %v1593 = vor.u32 %v1591, %v1592
    %v1594 = vshll.u32 2131351028, %v1585
    %v1595 = vshrl.u32 2102212464, %v1586
    %v1596 = vor.u32 %v1594, %v1595
    %v1597 = vshll.u32 2102212464, %v1585
    %v1598 = vshrl.u32 920167782, %v1586
    %v1599 = vor.u32 %v1597, %v1598
    %v1600 = vshll.u32 920167782, %v1585
    %v1601 = vshrl.u32 1326507024, %v1586
    %v1602 = vor.u32 %v1600, %v1601
    %vm1603 = vcmp.lt.s32.totalorder %v1584, 1
    %vm1604 = vcmp.lt.s32.totalorder %v1584, 2
    %vm1605 = vcmp.lt.s32.totalorder %v1584, 3
    %vm1606 = vcmp.lt.s32.totalorder %v1584, 4
    %v1607 = vsel %vm1603, %v1587, %v1590
    %v1608 = vsel %vm1606, %v1596, 2102212464
    %v1609 = vsel %vm1605, %v1593, %v1608
    %v1610 = vsel %vm1604, %v1607, %v1609
    %v1611 = vsel %vm1603, %v1590, %v1593
    %v1612 = vsel %vm1606, %v1599, 920167782
    %v1613 = vsel %vm1605, %v1596, %v1612
    %v1614 = vsel %vm1604, %v1611, %v1613
    %v1615 = vsel %vm1603, %v1593, %v1596
    %v1616 = vsel %vm1606, %v1602, 1326507024
    %v1617 = vsel %vm1605, %v1599, %v1616
    %v1618 = vsel %vm1604, %v1615, %v1617
    %v1619 = vshll.u32 %v1579, 8
    %v1620 = vmul.u32.u64.compose %v1619, %v1618
    %v1621 = vextract.low.u32 %v1620
    %v1622 = vextract.high.u32 %v1620
    %v1623 = vmul.u32.u64.compose %v1619, %v1614
    %v1624 = vextract.low.u32 %v1623
    %v1625 = vextract.high.u32 %v1623
    %v1626 = vmul.u32 %v1619, %v1610
    %v1627 = vadd.s32 %v1622, %v1624
    %vm1628 = vc.u32 %v1622, %v1624
    %v1629 = vadd.s32 %v1625, 1
    %v1630 = vsel %vm1628, %v1629, %v1625
    %v1631 = vadd.s32 %v1626, %v1630
    %v1632 = vadd.s32 %v1631, 536870912
    %v1633 = vshrl.u32 %v1632, 30
    %v1634 = vshll.u32 %v1633, 30
    %v1635 = vsub.s32 %v1631, %v1634
    %vm1636 = vcmp.lt.s32.totalorder %v1635, 0
    %v1637 = vsub.s32 0, %v1635
    %v1638 = vsel %vm1636, %v1637, %v1635
    %v1639 = vclz %v1638
    %v1640 = vsub.s32 %v1639, 2
    %vm1641 = vcmp.gt.s32.totalorder 0, %v1640
    %v1642 = vsel %vm1641, 0, %v1640
    %v1643 = vsub.s32 32, %v1642
    %v1644 = vshll.u32 %v1635, %v1642
    %v1645 = vshrl.u32 %v1627, %v1643
    %v1646 = vor.u32 %v1644, %v1645
    %v1647 = vsub.s32 4294967266, %v1642
    %v1648 = vadd.s32 %v1647, 127
    %v1649 = vshll.u32 %v1648, 23
    %v1650 = vor.u32 4788187, %v1649
    %v1651 = vand.u32 2147483647, %v1650
    %v1653 = vcvt.s32.f32 %v1646
    %v1654 = vmul.f32 %v1653, %v1651
    %v1655 = vxor.u32 %v1654, 2147483648
    %v1656 = vsel %vm1573, %v1655, %v1654
    %v1657 = vsub.s32 4, %v1633
    %v1658 = vsel %vm1573, %v1657, %v1633
    %v1659 = vsel %vm1572, %v1258, %v1656
    %v1660 = vsel %vm1572, 0, %v1658
    %v1661 = vcosq.f32.pop %v1659
    %v1662 = vsinq.f32.pop %v1659
    %vm1663 = vweird.f32 %v1258
    %v1664 = vadd.s32 %v1660, 3
    %v1665 = vand.u32 %v1664, 3
    %vm1666 = vcmp.lt.s32.totalorder %v1665, 2
    %vm1667 = vcmp.eq.s32.totalorder %v1665, 0
    %v1668 = vxor.u32 %v1662, 2147483648
    %v1669 = vsel %vm1667, %v1661, %v1668
    %vm1670 = vcmp.eq.s32.totalorder %v1665, 2
    %v1671 = vxor.u32 %v1661, 2147483648
    %v1672 = vsel %vm1670, %v1671, %v1662
    %v1673 = vsel %vm1666, %v1669, %v1672
    %v1674 = vsel %vm1663, nan, %v1673
    %v1675 = vmul.f32 %v1249, %v1570
    %v1676 = vmul.f32 %v1256, %v1674
    %v1677 = vmul.f32 %v1140, %v1465
    %v1678 = vmul.f32 %v1141, %v1466
    %v1679 = vmul.f32 %v1142, %v1675
    %v1680 = vmul.f32 %v1143, %v1676
    %1681 = vst [vmem:[#allocation11] sm:$0xff] %v1677
    %1682 = vst [vmem:[#allocation11 + $0x8] sm:$0xff] %v1678
    %1683 = vst [vmem:[#allocation11 + $0x10] sm:$0xff] %v1679
    %1684 = vst [vmem:[#allocation11 + $0x18] sm:$0xff] %v1680
    %v1685 = vmul.f32 %v819, %v1132
    %v1686 = vmul.f32 %v923, %v1133
    %v1687 = vmul.f32 %v1027, %v1134
    %v1688 = vmul.f32 %v1131, %v1135
    %v1689 = vadd.f32 %v1685, %v1677
    %v1690 = vadd.f32 %v1686, %v1678
    %v1691 = vadd.f32 %v1687, %v1679
    %v1692 = vadd.f32 %v1688, %v1680
    %1693 = vst [vmem:[#allocation10] sm:$0xff] %v1689
    %1694 = vst [vmem:[#allocation10 + $0x8] sm:$0xff] %v1690
    %1695 = vst [vmem:[#allocation10 + $0x10] sm:$0xff] %v1691
    %1696 = vst [vmem:[#allocation10 + $0x18] sm:$0xff] %v1692
    // Predicated region
    $region26: #{tpu_custom_call.1} parent=1 // pred_check
      _
    $region27: #{tpu_custom_call.1} parent=1 // pred_check_branch
      %1698 = sbr.rel (0) target = $region29
    $region28: #{tpu_custom_call.1} parent=1 // pred_region
      %s1700 = ssub.s32 512, 512
      %1701 = vsyncadd [#allocation6], %s1700
      %s1702 = sshll.u32 [#allocation10], 4
      %s1703 = int_to_ptr.vmem [resolvable:$true] %s1702
      %1708 = dma.vmem_to_hbm [thread:$0]  %s1703, 512, %s4, [#allocation6], 256, 256, 16
    $region29: #{tpu_custom_call.1} parent=1 // pred_fallthru
      _
    // Predicated region
    $region30: #{tpu_custom_call.1} parent=1 // pred_check
      _
    $region31: #{tpu_custom_call.1} parent=1 // pred_check_branch
      %1710 = sbr.rel (0) target = $region33
    $region32: #{tpu_custom_call.1} parent=1 // pred_region
      %s1712 = ssub.s32 512, 512
      %1713 = vsyncadd [#allocation12], %s1712
      %s1714 = sshll.u32 [#allocation11], 4
      %s1715 = int_to_ptr.vmem [resolvable:$true] %s1714
      %1720 = dma.vmem_to_hbm [thread:$0]  %s1715, 512, %s5, [#allocation12], 256, 256, 16
    $region33: #{tpu_custom_call.1} parent=1 // pred_fallthru
      _
    // Predicated region
    $region34: #{tpu_custom_call.1} parent=1 // pred_check
      _
    $region35: #{tpu_custom_call.1} parent=1 // pred_check_branch
      %1722 = sbr.rel (0) target = $region37
    $region36: #{tpu_custom_call.1} parent=1 // pred_region
      %1723 = dma.done [#allocation6], 512
    $region37: #{tpu_custom_call.1} parent=1 // pred_fallthru
      _
    // Predicated region
    $region38: #{tpu_custom_call.1} parent=1 // pred_check
      _
    $region39: #{tpu_custom_call.1} parent=1 // pred_check_branch
      %1725 = sbr.rel (0) target = $region41
    $region40: #{tpu_custom_call.1} parent=1 // pred_region
      %1726 = dma.done [#allocation12], 512
    $region41: #{tpu_custom_call.1} parent=1 // pred_fallthru
      _
    %1727 = vsyncpa [#allocation5], 1
    %1728 = vsyncpa [#allocation8], 1
    %1729 = vsyncpa [#allocation6], 1
    %1730 = vsyncpa [#allocation12], 1

</llo_original>
